<compile_context>
chip_gen: v6e
topology: v6e:2x2x1
jax: 0.10.0
libtpu: 0.0.40
codegen_flags: <defaults>
</compile_context>

<pallas_src>
import functools

import jax
import jax.numpy as jnp
from jax.experimental import pallas as pl
from jax.experimental.pallas import tpu as pltpu

# Model hyper-parameters (small shapes consistent with the module).
CONVS = (4, 8, 16)        # Conv1d channel sizes: convs argument
KERNEL_SIZE = 3
HIDDEN = 32               # hidden_dim
NUM_LAYERS = 2            # layer_dim
OUTPUT_DIM = 1
BATCH = 2
SEQ = 16
BN_EPS = 1e-5
OUT_PAD = 128             # lane-dense padded output width


def _conv_lstm_fc_kernel(n_conv, n_lstm, hidden, ksize, batch, *refs):
    """Fused Conv1d+BN(folded)+ReLU+MaxPool1d(2) stack + multi-layer LSTM + FC.

    refs = (x_ref,
            (conv_w2d_i, conv_b_i) * n_conv,          # (K*Cin, Cout), (1, Cout)
            (w_ih_l, w_hh_l, bias_l) * n_lstm,        # (in,4H), (H,4H), (1,4H); gate order i,f,o,g
            fc_w, fc_b,                               # (B*H, OUT_PAD), (1, OUT_PAD)
            o_ref)                                    # (n_lstm, OUT_PAD)
    """
    x_ref = refs[0]
    conv_refs = refs[1:1 + 2 * n_conv]
    lstm_refs = refs[1 + 2 * n_conv:1 + 2 * n_conv + 3 * n_lstm]
    fc_w_ref = refs[1 + 2 * n_conv + 3 * n_lstm]
    fc_b_ref = refs[2 + 2 * n_conv + 3 * n_lstm]
    o_ref = refs[-1]

    # ---- Conv1d -> folded BN -> ReLU -> MaxPool1d(2), one im2col matmul per layer ---
    feats = []                                            # per-batch (t_len, C_feat)
    for b in range(batch):
        y = x_ref[b].astype(jnp.float32)                  # (T, C_in)
        for i in range(n_conv):
            w = conv_refs[2 * i][...]                     # (K*C_in, C_out)
            cb = conv_refs[2 * i + 1][...]                # (1, C_out)
            l_in = y.shape[0]
            l_out = l_in - ksize + 1
            # im2col: lane-concat of K shifted views -> single MXU matmul.
            patches = jnp.concatenate(
                [y[k:k + l_out, :] for k in range(ksize)], axis=1)        # (l_out, K*C_in)
            acc = jnp.dot(patches, w, preferred_element_type=jnp.float32) + cb
            acc = jnp.maximum(acc, 0.0)                   # ReLU
            l_pool = l_out // 2                           # MaxPool1d(2), floor
            even = jnp.concatenate([acc[2 * j:2 * j + 1, :] for j in range(l_pool)], axis=0)
            odd = jnp.concatenate([acc[2 * j + 1:2 * j + 2, :] for j in range(l_pool)], axis=0)
            y = jnp.maximum(even, odd)                    # (l_pool, C_out)
        feats.append(y)

    t_len = feats[0].shape[0]
    # Time-major stacked sequence: rows [t0:(b0..bB-1), t1:(...), ...] -> (t_len*B, C_feat)
    x_stk = jnp.concatenate(
        [feats[b][t:t + 1, :] for t in range(t_len) for b in range(batch)], axis=0)

    # ---- nn.LSTM(batch_first=True), layer-major, hoisted input projection ----------
    h_finals = []
    for l in range(n_lstm):
        w_ih = lstm_refs[3 * l][...]                      # (in_l, 4H), gate order i,f,o,g
        w_hh = lstm_refs[3 * l + 1][...]                  # (H, 4H)
        bias = lstm_refs[3 * l + 2][...]                  # (1, 4H) = b_ih + b_hh
        # Input projection for all timesteps at once (off the recurrent critical path).
        xp = jnp.dot(x_stk, w_ih, preferred_element_type=jnp.float32) + bias  # (t_len*B, 4H)
        h = jnp.zeros((batch, hidden), jnp.float32)
        c = jnp.zeros((batch, hidden), jnp.float32)
        outs = []
        for t in range(t_len):
            gates = xp[t * batch:(t + 1) * batch, :] + jnp.dot(
                h, w_hh, preferred_element_type=jnp.float32)              # (B, 4H)
            sig = jax.nn.sigmoid(gates[:, :3 * hidden])   # one EUP call for i,f,o
            g_g = jnp.tanh(gates[:, 3 * hidden:])         # one tanh for g
            i_g = sig[:, :hidden]
            f_g = sig[:, hidden:2 * hidden]
            o_g = sig[:, 2 * hidden:3 * hidden]
            c = f_g * c + i_g * g_g
            h = o_g * jnp.tanh(c)
            outs.append(h)
        x_stk = jnp.concatenate(outs, axis=0)             # next layer's input, time-major
        h_finals.append(h)                                # final hidden of layer l, (B, H)

    # ---- fused FC on the faithful h_out.view(-1, H*L) interleave --------------------
    # out[l, :] = sum_b h_finals[l][b, :] @ W^T[b*H:(b+1)*H, :] + b_fc   (lane-padded)
    acc_fc = None
    for b in range(batch):
        h_b = jnp.concatenate(
            [h_finals[l][b:b + 1, :] for l in range(n_lstm)], axis=0)     # (L, H)
        w_b = fc_w_ref[b * hidden:(b + 1) * hidden, :]                    # (H, OUT_PAD)
        term = jnp.dot(h_b, w_b, preferred_element_type=jnp.float32)
        acc_fc = term if acc_fc is None else acc_fc + term
    o_ref[...] = acc_fc + fc_b_ref[...]                                   # (L, OUT_PAD)


def init_params(key):
    keys = iter(jax.random.split(key, 64))
    convs = []
    for cin, cout in zip(CONVS[:-1], CONVS[1:]):
        convs.append(dict(
            w=0.1 * jax.random.normal(next(keys), (cout, cin, KERNEL_SIZE), jnp.float32),
            b=0.1 * jax.random.normal(next(keys), (cout,), jnp.float32),
            gamma=1.0 + 0.1 * jax.random.normal(next(keys), (cout,), jnp.float32),
            beta=0.1 * jax.random.normal(next(keys), (cout,), jnp.float32),
            mean=0.1 * jax.random.normal(next(keys), (cout,), jnp.float32),
            var=1.0 + 0.1 * jnp.abs(jax.random.normal(next(keys), (cout,), jnp.float32)),
        ))
    lstm = []
    in_sz = CONVS[-1]
    for _ in range(NUM_LAYERS):
        lstm.append(dict(
            w_ih=0.1 * jax.random.normal(next(keys), (4 * HIDDEN, in_sz), jnp.float32),
            w_hh=0.1 * jax.random.normal(next(keys), (4 * HIDDEN, HIDDEN), jnp.float32),
            b_ih=0.1 * jax.random.normal(next(keys), (4 * HIDDEN,), jnp.float32),
            b_hh=0.1 * jax.random.normal(next(keys), (4 * HIDDEN,), jnp.float32),
        ))
        in_sz = HIDDEN
    fc_w = 0.1 * jax.random.normal(next(keys), (OUTPUT_DIM, HIDDEN * NUM_LAYERS), jnp.float32)
    fc_b = 0.1 * jax.random.normal(next(keys), (OUTPUT_DIM,), jnp.float32)
    return dict(convs=convs, lstm=lstm, fc_w=fc_w, fc_b=fc_b)


def _permute_gates(m):
    """Permute PyTorch (i,f,g,o) gate columns to (i,f,o,g) on the last axis."""
    return jnp.concatenate(
        [m[..., :2 * HIDDEN], m[..., 3 * HIDDEN:], m[..., 2 * HIDDEN:3 * HIDDEN]], axis=-1)


def conv_lstm_forward(params, x):
    B = x.shape[0]
    n_conv = len(CONVS) - 1
    n_lstm = NUM_LAYERS
    # The original module's h_out.view(-1, H*L) only typechecks when B == num_layers.
    assert B == n_lstm, "faithful reproduction of the PyTorch view() requires batch == num_layers"

    inputs = [x]
    for cp in params["convs"]:
        # Fold eval-mode BatchNorm1d into the conv weight/bias.
        scale = cp["gamma"] / jnp.sqrt(cp["var"] + BN_EPS)          # (C_out,)
        w = cp["w"] * scale[:, None, None]                          # (C_out, C_in, K)
        b = (cp["b"] - cp["mean"]) * scale + cp["beta"]             # (C_out,)
        cout, cin, k = w.shape
        # (C_out, C_in, K) -> (K, C_in, C_out) -> (K*C_in, C_out); rows ordered k*C_in + c
        inputs.append(jnp.transpose(w, (2, 1, 0)).reshape(k * cin, cout))
        inputs.append(b.reshape(1, -1))                             # (1, C_out)
    for lp in params["lstm"]:
        inputs.append(_permute_gates(lp["w_ih"].T))                 # (in_l, 4H)
        inputs.append(_permute_gates(lp["w_hh"].T))                 # (H, 4H)
        inputs.append(_permute_gates((lp["b_ih"] + lp["b_hh"]).reshape(1, -1)))  # (1, 4H)

    # Lane-dense FC params: pad the output dim (1) to 128 with zero columns.
    fc_wp = jnp.zeros((HIDDEN * n_lstm, OUT_PAD), jnp.float32)
    fc_wp = fc_wp.at[:, :OUTPUT_DIM].set(params["fc_w"].T)
    fc_bp = jnp.zeros((1, OUT_PAD), jnp.float32)
    fc_bp = fc_bp.at[:, :OUTPUT_DIM].set(params["fc_b"].reshape(1, -1))
    inputs += [fc_wp, fc_bp]

    kernel = functools.partial(_conv_lstm_fc_kernel, n_conv, n_lstm, HIDDEN,
                               KERNEL_SIZE, B)
    out_pad = pl.pallas_call(
        kernel,
        out_shape=jax.ShapeDtypeStruct((n_lstm, OUT_PAD), jnp.float32),
        in_specs=[pl.BlockSpec(memory_space=pltpu.MemorySpace.VMEM)] * len(inputs),
        out_specs=pl.BlockSpec(memory_space=pltpu.MemorySpace.VMEM),
    )(*inputs)
    # Slice the lane-padded output back to the real output dim.
    return out_pad[:, :OUTPUT_DIM]


if __name__ == "__main__":
    key = jax.random.PRNGKey(0)
    pkey, xkey = jax.random.split(key)
    params = init_params(pkey)
    # Module input is (batch, seq_len, features) = (B, T, convs[0]).
    x = jax.random.normal(xkey, (BATCH, SEQ, CONVS[0]), jnp.float32)

    fwd = jax.jit(functools.partial(conv_lstm_forward, params))
    out = fwd(x)
    jax.block_until_ready(out)
    assert out.shape == (BATCH, OUTPUT_DIM) and out.dtype == jnp.float32
    print("KERNEL_OK")
</pallas_src>

<mosaic_0001>
module attributes {stable_mosaic.version = 11 : i64} {
  func.func @_conv_lstm_fc_kernel(%arg0: memref<2x16x4xf32, #tpu.memory_space<vmem>>, %arg1: memref<12x8xf32, #tpu.memory_space<vmem>>, %arg2: memref<1x8xf32, #tpu.memory_space<vmem>>, %arg3: memref<24x16xf32, #tpu.memory_space<vmem>>, %arg4: memref<1x16xf32, #tpu.memory_space<vmem>>, %arg5: memref<16x128xf32, #tpu.memory_space<vmem>>, %arg6: memref<32x128xf32, #tpu.memory_space<vmem>>, %arg7: memref<1x128xf32, #tpu.memory_space<vmem>>, %arg8: memref<32x128xf32, #tpu.memory_space<vmem>>, %arg9: memref<32x128xf32, #tpu.memory_space<vmem>>, %arg10: memref<1x128xf32, #tpu.memory_space<vmem>>, %arg11: memref<64x128xf32, #tpu.memory_space<vmem>>, %arg12: memref<1x128xf32, #tpu.memory_space<vmem>>, %arg13: memref<2x128xf32, #tpu.memory_space<vmem>>) attributes {dimension_semantics = [], scalar_prefetch = 0 : i64, scratch_operands = 0 : i64, tpu.core_type = #tpu.core_type<tc>} {
    %c0 = arith.constant 0 : index
    %c0_0 = arith.constant 0 : index
    %c0_1 = arith.constant 0 : index
    %0 = vector.load %arg0[%c0, %c0_0, %c0_1] : memref<2x16x4xf32, #tpu.memory_space<vmem>>, vector<1x16x4xf32>
    %1 = vector.shape_cast %0 : vector<1x16x4xf32> to vector<16x4xf32>
    %c0_2 = arith.constant 0 : index
    %c0_3 = arith.constant 0 : index
    %2 = vector.load %arg1[%c0_2, %c0_3] : memref<12x8xf32, #tpu.memory_space<vmem>>, vector<12x8xf32>
    %c0_4 = arith.constant 0 : index
    %c0_5 = arith.constant 0 : index
    %3 = vector.load %arg2[%c0_4, %c0_5] : memref<1x8xf32, #tpu.memory_space<vmem>>, vector<1x8xf32>
    %4 = vector.extract_strided_slice %1 {offsets = [0, 0], sizes = [14, 4], strides = [1, 1]} : vector<16x4xf32> to vector<14x4xf32>
    %5 = vector.extract_strided_slice %1 {offsets = [1, 0], sizes = [14, 4], strides = [1, 1]} : vector<16x4xf32> to vector<14x4xf32>
    %6 = vector.extract_strided_slice %1 {offsets = [2, 0], sizes = [14, 4], strides = [1, 1]} : vector<16x4xf32> to vector<14x4xf32>
    %7 = tpu.concatenate %4, %5, %6 in 1 : vector<14x4xf32>, vector<14x4xf32>, vector<14x4xf32> -> vector<14x12xf32>
    %cst = arith.constant dense<0.000000e+00> : vector<14x8xf32>
    %8 = tpu.matmul %7, %2, %cst {dimension_numbers = #tpu.dot_dimension_numbers<[1], [0], [0], [1], [0, 0, 1, 1], [], []>} : vector<14x12xf32>, vector<12x8xf32>, vector<14x8xf32> -> vector<14x8xf32>
    %9 = vector.broadcast %3 : vector<1x8xf32> to vector<14x8xf32>
    %10 = arith.addf %8, %9 : vector<14x8xf32>
    %cst_6 = arith.constant 0.000000e+00 : f32
    %11 = vector.broadcast %cst_6 : f32 to vector<14x8xf32>
    %12 = arith.maximumf %10, %11 : vector<14x8xf32>
    %13 = vector.extract_strided_slice %12 {offsets = [0, 0], sizes = [1, 8], strides = [1, 1]} : vector<14x8xf32> to vector<1x8xf32>
    %14 = vector.extract_strided_slice %12 {offsets = [2, 0], sizes = [1, 8], strides = [1, 1]} : vector<14x8xf32> to vector<1x8xf32>
    %15 = vector.extract_strided_slice %12 {offsets = [4, 0], sizes = [1, 8], strides = [1, 1]} : vector<14x8xf32> to vector<1x8xf32>
    %16 = vector.extract_strided_slice %12 {offsets = [6, 0], sizes = [1, 8], strides = [1, 1]} : vector<14x8xf32> to vector<1x8xf32>
    %17 = vector.extract_strided_slice %12 {offsets = [8, 0], sizes = [1, 8], strides = [1, 1]} : vector<14x8xf32> to vector<1x8xf32>
    %18 = vector.extract_strided_slice %12 {offsets = [10, 0], sizes = [1, 8], strides = [1, 1]} : vector<14x8xf32> to vector<1x8xf32>
    %19 = vector.extract_strided_slice %12 {offsets = [12, 0], sizes = [1, 8], strides = [1, 1]} : vector<14x8xf32> to vector<1x8xf32>
    %20 = tpu.concatenate %13, %14, %15, %16, %17, %18, %19 in 0 : vector<1x8xf32>, vector<1x8xf32>, vector<1x8xf32>, vector<1x8xf32>, vector<1x8xf32>, vector<1x8xf32>, vector<1x8xf32> -> vector<7x8xf32>
    %21 = vector.extract_strided_slice %12 {offsets = [1, 0], sizes = [1, 8], strides = [1, 1]} : vector<14x8xf32> to vector<1x8xf32>
    %22 = vector.extract_strided_slice %12 {offsets = [3, 0], sizes = [1, 8], strides = [1, 1]} : vector<14x8xf32> to vector<1x8xf32>
    %23 = vector.extract_strided_slice %12 {offsets = [5, 0], sizes = [1, 8], strides = [1, 1]} : vector<14x8xf32> to vector<1x8xf32>
    %24 = vector.extract_strided_slice %12 {offsets = [7, 0], sizes = [1, 8], strides = [1, 1]} : vector<14x8xf32> to vector<1x8xf32>
    %25 = vector.extract_strided_slice %12 {offsets = [9, 0], sizes = [1, 8], strides = [1, 1]} : vector<14x8xf32> to vector<1x8xf32>
    %26 = vector.extract_strided_slice %12 {offsets = [11, 0], sizes = [1, 8], strides = [1, 1]} : vector<14x8xf32> to vector<1x8xf32>
    %27 = vector.extract_strided_slice %12 {offsets = [13, 0], sizes = [1, 8], strides = [1, 1]} : vector<14x8xf32> to vector<1x8xf32>
    %28 = tpu.concatenate %21, %22, %23, %24, %25, %26, %27 in 0 : vector<1x8xf32>, vector<1x8xf32>, vector<1x8xf32>, vector<1x8xf32>, vector<1x8xf32>, vector<1x8xf32>, vector<1x8xf32> -> vector<7x8xf32>
    %29 = arith.maximumf %20, %28 : vector<7x8xf32>
    %c0_7 = arith.constant 0 : index
    %c0_8 = arith.constant 0 : index
    %30 = vector.load %arg3[%c0_7, %c0_8] : memref<24x16xf32, #tpu.memory_space<vmem>>, vector<24x16xf32>
    %c0_9 = arith.constant 0 : index
    %c0_10 = arith.constant 0 : index
    %31 = vector.load %arg4[%c0_9, %c0_10] : memref<1x16xf32, #tpu.memory_space<vmem>>, vector<1x16xf32>
    %32 = vector.extract_strided_slice %29 {offsets = [0, 0], sizes = [5, 8], strides = [1, 1]} : vector<7x8xf32> to vector<5x8xf32>
    %33 = vector.extract_strided_slice %29 {offsets = [1, 0], sizes = [5, 8], strides = [1, 1]} : vector<7x8xf32> to vector<5x8xf32>
    %34 = vector.extract_strided_slice %29 {offsets = [2, 0], sizes = [5, 8], strides = [1, 1]} : vector<7x8xf32> to vector<5x8xf32>
    %35 = tpu.concatenate %32, %33, %34 in 1 : vector<5x8xf32>, vector<5x8xf32>, vector<5x8xf32> -> vector<5x24xf32>
    %cst_11 = arith.constant dense<0.000000e+00> : vector<5x16xf32>
    %36 = tpu.matmul %35, %30, %cst_11 {dimension_numbers = #tpu.dot_dimension_numbers<[1], [0], [0], [1], [0, 0, 1, 1], [], []>} : vector<5x24xf32>, vector<24x16xf32>, vector<5x16xf32> -> vector<5x16xf32>
    %37 = vector.broadcast %31 : vector<1x16xf32> to vector<5x16xf32>
    %38 = arith.addf %36, %37 : vector<5x16xf32>
    %cst_12 = arith.constant 0.000000e+00 : f32
    %39 = vector.broadcast %cst_12 : f32 to vector<5x16xf32>
    %40 = arith.maximumf %38, %39 : vector<5x16xf32>
    %41 = vector.extract_strided_slice %40 {offsets = [0, 0], sizes = [1, 16], strides = [1, 1]} : vector<5x16xf32> to vector<1x16xf32>
    %42 = vector.extract_strided_slice %40 {offsets = [2, 0], sizes = [1, 16], strides = [1, 1]} : vector<5x16xf32> to vector<1x16xf32>
    %43 = tpu.concatenate %41, %42 in 0 : vector<1x16xf32>, vector<1x16xf32> -> vector<2x16xf32>
    %44 = vector.extract_strided_slice %40 {offsets = [1, 0], sizes = [1, 16], strides = [1, 1]} : vector<5x16xf32> to vector<1x16xf32>
    %45 = vector.extract_strided_slice %40 {offsets = [3, 0], sizes = [1, 16], strides = [1, 1]} : vector<5x16xf32> to vector<1x16xf32>
    %46 = tpu.concatenate %44, %45 in 0 : vector<1x16xf32>, vector<1x16xf32> -> vector<2x16xf32>
    %47 = arith.maximumf %43, %46 : vector<2x16xf32>
    %c1 = arith.constant 1 : index
    %c0_13 = arith.constant 0 : index
    %c0_14 = arith.constant 0 : index
    %48 = vector.load %arg0[%c1, %c0_13, %c0_14] : memref<2x16x4xf32, #tpu.memory_space<vmem>>, vector<1x16x4xf32>
    %49 = vector.shape_cast %48 : vector<1x16x4xf32> to vector<16x4xf32>
    %c0_15 = arith.constant 0 : index
    %c0_16 = arith.constant 0 : index
    %50 = vector.load %arg1[%c0_15, %c0_16] : memref<12x8xf32, #tpu.memory_space<vmem>>, vector<12x8xf32>
    %c0_17 = arith.constant 0 : index
    %c0_18 = arith.constant 0 : index
    %51 = vector.load %arg2[%c0_17, %c0_18] : memref<1x8xf32, #tpu.memory_space<vmem>>, vector<1x8xf32>
    %52 = vector.extract_strided_slice %49 {offsets = [0, 0], sizes = [14, 4], strides = [1, 1]} : vector<16x4xf32> to vector<14x4xf32>
    %53 = vector.extract_strided_slice %49 {offsets = [1, 0], sizes = [14, 4], strides = [1, 1]} : vector<16x4xf32> to vector<14x4xf32>
    %54 = vector.extract_strided_slice %49 {offsets = [2, 0], sizes = [14, 4], strides = [1, 1]} : vector<16x4xf32> to vector<14x4xf32>
    %55 = tpu.concatenate %52, %53, %54 in 1 : vector<14x4xf32>, vector<14x4xf32>, vector<14x4xf32> -> vector<14x12xf32>
    %cst_19 = arith.constant dense<0.000000e+00> : vector<14x8xf32>
    %56 = tpu.matmul %55, %50, %cst_19 {dimension_numbers = #tpu.dot_dimension_numbers<[1], [0], [0], [1], [0, 0, 1, 1], [], []>} : vector<14x12xf32>, vector<12x8xf32>, vector<14x8xf32> -> vector<14x8xf32>
    %57 = vector.broadcast %51 : vector<1x8xf32> to vector<14x8xf32>
    %58 = arith.addf %56, %57 : vector<14x8xf32>
    %cst_20 = arith.constant 0.000000e+00 : f32
    %59 = vector.broadcast %cst_20 : f32 to vector<14x8xf32>
    %60 = arith.maximumf %58, %59 : vector<14x8xf32>
    %61 = vector.extract_strided_slice %60 {offsets = [0, 0], sizes = [1, 8], strides = [1, 1]} : vector<14x8xf32> to vector<1x8xf32>
    %62 = vector.extract_strided_slice %60 {offsets = [2, 0], sizes = [1, 8], strides = [1, 1]} : vector<14x8xf32> to vector<1x8xf32>
    %63 = vector.extract_strided_slice %60 {offsets = [4, 0], sizes = [1, 8], strides = [1, 1]} : vector<14x8xf32> to vector<1x8xf32>
    %64 = vector.extract_strided_slice %60 {offsets = [6, 0], sizes = [1, 8], strides = [1, 1]} : vector<14x8xf32> to vector<1x8xf32>
    %65 = vector.extract_strided_slice %60 {offsets = [8, 0], sizes = [1, 8], strides = [1, 1]} : vector<14x8xf32> to vector<1x8xf32>
    %66 = vector.extract_strided_slice %60 {offsets = [10, 0], sizes = [1, 8], strides = [1, 1]} : vector<14x8xf32> to vector<1x8xf32>
    %67 = vector.extract_strided_slice %60 {offsets = [12, 0], sizes = [1, 8], strides = [1, 1]} : vector<14x8xf32> to vector<1x8xf32>
    %68 = tpu.concatenate %61, %62, %63, %64, %65, %66, %67 in 0 : vector<1x8xf32>, vector<1x8xf32>, vector<1x8xf32>, vector<1x8xf32>, vector<1x8xf32>, vector<1x8xf32>, vector<1x8xf32> -> vector<7x8xf32>
    %69 = vector.extract_strided_slice %60 {offsets = [1, 0], sizes = [1, 8], strides = [1, 1]} : vector<14x8xf32> to vector<1x8xf32>
    %70 = vector.extract_strided_slice %60 {offsets = [3, 0], sizes = [1, 8], strides = [1, 1]} : vector<14x8xf32> to vector<1x8xf32>
    %71 = vector.extract_strided_slice %60 {offsets = [5, 0], sizes = [1, 8], strides = [1, 1]} : vector<14x8xf32> to vector<1x8xf32>
    %72 = vector.extract_strided_slice %60 {offsets = [7, 0], sizes = [1, 8], strides = [1, 1]} : vector<14x8xf32> to vector<1x8xf32>
    %73 = vector.extract_strided_slice %60 {offsets = [9, 0], sizes = [1, 8], strides = [1, 1]} : vector<14x8xf32> to vector<1x8xf32>
    %74 = vector.extract_strided_slice %60 {offsets = [11, 0], sizes = [1, 8], strides = [1, 1]} : vector<14x8xf32> to vector<1x8xf32>
    %75 = vector.extract_strided_slice %60 {offsets = [13, 0], sizes = [1, 8], strides = [1, 1]} : vector<14x8xf32> to vector<1x8xf32>
    %76 = tpu.concatenate %69, %70, %71, %72, %73, %74, %75 in 0 : vector<1x8xf32>, vector<1x8xf32>, vector<1x8xf32>, vector<1x8xf32>, vector<1x8xf32>, vector<1x8xf32>, vector<1x8xf32> -> vector<7x8xf32>
    %77 = arith.maximumf %68, %76 : vector<7x8xf32>
    %c0_21 = arith.constant 0 : index
    %c0_22 = arith.constant 0 : index
    %78 = vector.load %arg3[%c0_21, %c0_22] : memref<24x16xf32, #tpu.memory_space<vmem>>, vector<24x16xf32>
    %c0_23 = arith.constant 0 : index
    %c0_24 = arith.constant 0 : index
    %79 = vector.load %arg4[%c0_23, %c0_24] : memref<1x16xf32, #tpu.memory_space<vmem>>, vector<1x16xf32>
    %80 = vector.extract_strided_slice %77 {offsets = [0, 0], sizes = [5, 8], strides = [1, 1]} : vector<7x8xf32> to vector<5x8xf32>
    %81 = vector.extract_strided_slice %77 {offsets = [1, 0], sizes = [5, 8], strides = [1, 1]} : vector<7x8xf32> to vector<5x8xf32>
    %82 = vector.extract_strided_slice %77 {offsets = [2, 0], sizes = [5, 8], strides = [1, 1]} : vector<7x8xf32> to vector<5x8xf32>
    %83 = tpu.concatenate %80, %81, %82 in 1 : vector<5x8xf32>, vector<5x8xf32>, vector<5x8xf32> -> vector<5x24xf32>
    %cst_25 = arith.constant dense<0.000000e+00> : vector<5x16xf32>
    %84 = tpu.matmul %83, %78, %cst_25 {dimension_numbers = #tpu.dot_dimension_numbers<[1], [0], [0], [1], [0, 0, 1, 1], [], []>} : vector<5x24xf32>, vector<24x16xf32>, vector<5x16xf32> -> vector<5x16xf32>
    %85 = vector.broadcast %79 : vector<1x16xf32> to vector<5x16xf32>
    %86 = arith.addf %84, %85 : vector<5x16xf32>
    %cst_26 = arith.constant 0.000000e+00 : f32
    %87 = vector.broadcast %cst_26 : f32 to vector<5x16xf32>
    %88 = arith.maximumf %86, %87 : vector<5x16xf32>
    %89 = vector.extract_strided_slice %88 {offsets = [0, 0], sizes = [1, 16], strides = [1, 1]} : vector<5x16xf32> to vector<1x16xf32>
    %90 = vector.extract_strided_slice %88 {offsets = [2, 0], sizes = [1, 16], strides = [1, 1]} : vector<5x16xf32> to vector<1x16xf32>
    %91 = tpu.concatenate %89, %90 in 0 : vector<1x16xf32>, vector<1x16xf32> -> vector<2x16xf32>
    %92 = vector.extract_strided_slice %88 {offsets = [1, 0], sizes = [1, 16], strides = [1, 1]} : vector<5x16xf32> to vector<1x16xf32>
    %93 = vector.extract_strided_slice %88 {offsets = [3, 0], sizes = [1, 16], strides = [1, 1]} : vector<5x16xf32> to vector<1x16xf32>
    %94 = tpu.concatenate %92, %93 in 0 : vector<1x16xf32>, vector<1x16xf32> -> vector<2x16xf32>
    %95 = arith.maximumf %91, %94 : vector<2x16xf32>
    %96 = vector.extract_strided_slice %47 {offsets = [0, 0], sizes = [1, 16], strides = [1, 1]} : vector<2x16xf32> to vector<1x16xf32>
    %97 = vector.extract_strided_slice %95 {offsets = [0, 0], sizes = [1, 16], strides = [1, 1]} : vector<2x16xf32> to vector<1x16xf32>
    %98 = vector.extract_strided_slice %47 {offsets = [1, 0], sizes = [1, 16], strides = [1, 1]} : vector<2x16xf32> to vector<1x16xf32>
    %99 = vector.extract_strided_slice %95 {offsets = [1, 0], sizes = [1, 16], strides = [1, 1]} : vector<2x16xf32> to vector<1x16xf32>
    %100 = tpu.concatenate %96, %97, %98, %99 in 0 : vector<1x16xf32>, vector<1x16xf32>, vector<1x16xf32>, vector<1x16xf32> -> vector<4x16xf32>
    %c0_27 = arith.constant 0 : index
    %c0_28 = arith.constant 0 : index
    %101 = vector.load %arg5[%c0_27, %c0_28] : memref<16x128xf32, #tpu.memory_space<vmem>>, vector<16x128xf32>
    %c0_29 = arith.constant 0 : index
    %c0_30 = arith.constant 0 : index
    %102 = vector.load %arg6[%c0_29, %c0_30] : memref<32x128xf32, #tpu.memory_space<vmem>>, vector<32x128xf32>
    %c0_31 = arith.constant 0 : index
    %c0_32 = arith.constant 0 : index
    %103 = vector.load %arg7[%c0_31, %c0_32] : memref<1x128xf32, #tpu.memory_space<vmem>>, vector<1x128xf32>
    %cst_33 = arith.constant dense<0.000000e+00> : vector<4x128xf32>
    %104 = tpu.matmul %100, %101, %cst_33 {dimension_numbers = #tpu.dot_dimension_numbers<[1], [0], [0], [1], [0, 0, 1, 1], [], []>} : vector<4x16xf32>, vector<16x128xf32>, vector<4x128xf32> -> vector<4x128xf32>
    %105 = vector.broadcast %103 : vector<1x128xf32> to vector<4x128xf32>
    %106 = arith.addf %104, %105 : vector<4x128xf32>
    %cst_34 = arith.constant 0.000000e+00 : f32
    %107 = vector.broadcast %cst_34 : f32 to vector<2x32xf32>
    %cst_35 = arith.constant 0.000000e+00 : f32
    %108 = vector.broadcast %cst_35 : f32 to vector<2x32xf32>
    %109 = vector.extract_strided_slice %106 {offsets = [0, 0], sizes = [2, 128], strides = [1, 1]} : vector<4x128xf32> to vector<2x128xf32>
    %cst_36 = arith.constant dense<0.000000e+00> : vector<2x128xf32>
    %110 = tpu.matmul %107, %102, %cst_36 {dimension_numbers = #tpu.dot_dimension_numbers<[1], [0], [0], [1], [0, 0, 1, 1], [], []>} : vector<2x32xf32>, vector<32x128xf32>, vector<2x128xf32> -> vector<2x128xf32>
    %111 = arith.addf %109, %110 : vector<2x128xf32>
    %112 = vector.extract_strided_slice %111 {offsets = [0, 0], sizes = [2, 96], strides = [1, 1]} : vector<2x128xf32> to vector<2x96xf32>
    %113 = arith.negf %112 : vector<2x96xf32>
    %114 = math.exp %113 : vector<2x96xf32>
    %cst_37 = arith.constant 1.000000e+00 : f32
    %115 = vector.broadcast %cst_37 : f32 to vector<2x96xf32>
    %116 = arith.addf %115, %114 : vector<2x96xf32>
    %117 = arith.divf %115, %116 : vector<2x96xf32>
    %118 = vector.extract_strided_slice %111 {offsets = [0, 96], sizes = [2, 32], strides = [1, 1]} : vector<2x128xf32> to vector<2x32xf32>
    %119 = math.tanh %118 : vector<2x32xf32>
    %120 = vector.extract_strided_slice %117 {offsets = [0, 0], sizes = [2, 32], strides = [1, 1]} : vector<2x96xf32> to vector<2x32xf32>
    %121 = vector.extract_strided_slice %117 {offsets = [0, 32], sizes = [2, 32], strides = [1, 1]} : vector<2x96xf32> to vector<2x32xf32>
    %122 = vector.extract_strided_slice %117 {offsets = [0, 64], sizes = [2, 32], strides = [1, 1]} : vector<2x96xf32> to vector<2x32xf32>
    %123 = arith.mulf %121, %108 : vector<2x32xf32>
    %124 = arith.mulf %120, %119 : vector<2x32xf32>
    %125 = arith.addf %123, %124 : vector<2x32xf32>
    %126 = math.tanh %125 : vector<2x32xf32>
    %127 = arith.mulf %122, %126 : vector<2x32xf32>
    %128 = vector.extract_strided_slice %106 {offsets = [2, 0], sizes = [2, 128], strides = [1, 1]} : vector<4x128xf32> to vector<2x128xf32>
    %cst_38 = arith.constant dense<0.000000e+00> : vector<2x128xf32>
    %129 = tpu.matmul %127, %102, %cst_38 {dimension_numbers = #tpu.dot_dimension_numbers<[1], [0], [0], [1], [0, 0, 1, 1], [], []>} : vector<2x32xf32>, vector<32x128xf32>, vector<2x128xf32> -> vector<2x128xf32>
    %130 = arith.addf %128, %129 : vector<2x128xf32>
    %131 = vector.extract_strided_slice %130 {offsets = [0, 0], sizes = [2, 96], strides = [1, 1]} : vector<2x128xf32> to vector<2x96xf32>
    %132 = arith.negf %131 : vector<2x96xf32>
    %133 = math.exp %132 : vector<2x96xf32>
    %cst_39 = arith.constant 1.000000e+00 : f32
    %134 = vector.broadcast %cst_39 : f32 to vector<2x96xf32>
    %135 = arith.addf %134, %133 : vector<2x96xf32>
    %136 = arith.divf %134, %135 : vector<2x96xf32>
    %137 = vector.extract_strided_slice %130 {offsets = [0, 96], sizes = [2, 32], strides = [1, 1]} : vector<2x128xf32> to vector<2x32xf32>
    %138 = math.tanh %137 : vector<2x32xf32>
    %139 = vector.extract_strided_slice %136 {offsets = [0, 0], sizes = [2, 32], strides = [1, 1]} : vector<2x96xf32> to vector<2x32xf32>
    %140 = vector.extract_strided_slice %136 {offsets = [0, 32], sizes = [2, 32], strides = [1, 1]} : vector<2x96xf32> to vector<2x32xf32>
    %141 = vector.extract_strided_slice %136 {offsets = [0, 64], sizes = [2, 32], strides = [1, 1]} : vector<2x96xf32> to vector<2x32xf32>
    %142 = arith.mulf %140, %125 : vector<2x32xf32>
    %143 = arith.mulf %139, %138 : vector<2x32xf32>
    %144 = arith.addf %142, %143 : vector<2x32xf32>
    %145 = math.tanh %144 : vector<2x32xf32>
    %146 = arith.mulf %141, %145 : vector<2x32xf32>
    %147 = tpu.concatenate %127, %146 in 0 : vector<2x32xf32>, vector<2x32xf32> -> vector<4x32xf32>
    %c0_40 = arith.constant 0 : index
    %c0_41 = arith.constant 0 : index
    %148 = vector.load %arg8[%c0_40, %c0_41] : memref<32x128xf32, #tpu.memory_space<vmem>>, vector<32x128xf32>
    %c0_42 = arith.constant 0 : index
    %c0_43 = arith.constant 0 : index
    %149 = vector.load %arg9[%c0_42, %c0_43] : memref<32x128xf32, #tpu.memory_space<vmem>>, vector<32x128xf32>
    %c0_44 = arith.constant 0 : index
    %c0_45 = arith.constant 0 : index
    %150 = vector.load %arg10[%c0_44, %c0_45] : memref<1x128xf32, #tpu.memory_space<vmem>>, vector<1x128xf32>
    %cst_46 = arith.constant dense<0.000000e+00> : vector<4x128xf32>
    %151 = tpu.matmul %147, %148, %cst_46 {dimension_numbers = #tpu.dot_dimension_numbers<[1], [0], [0], [1], [0, 0, 1, 1], [], []>} : vector<4x32xf32>, vector<32x128xf32>, vector<4x128xf32> -> vector<4x128xf32>
    %152 = vector.broadcast %150 : vector<1x128xf32> to vector<4x128xf32>
    %153 = arith.addf %151, %152 : vector<4x128xf32>
    %cst_47 = arith.constant 0.000000e+00 : f32
    %154 = vector.broadcast %cst_47 : f32 to vector<2x32xf32>
    %cst_48 = arith.constant 0.000000e+00 : f32
    %155 = vector.broadcast %cst_48 : f32 to vector<2x32xf32>
    %156 = vector.extract_strided_slice %153 {offsets = [0, 0], sizes = [2, 128], strides = [1, 1]} : vector<4x128xf32> to vector<2x128xf32>
    %cst_49 = arith.constant dense<0.000000e+00> : vector<2x128xf32>
    %157 = tpu.matmul %154, %149, %cst_49 {dimension_numbers = #tpu.dot_dimension_numbers<[1], [0], [0], [1], [0, 0, 1, 1], [], []>} : vector<2x32xf32>, vector<32x128xf32>, vector<2x128xf32> -> vector<2x128xf32>
    %158 = arith.addf %156, %157 : vector<2x128xf32>
    %159 = vector.extract_strided_slice %158 {offsets = [0, 0], sizes = [2, 96], strides = [1, 1]} : vector<2x128xf32> to vector<2x96xf32>
    %160 = arith.negf %159 : vector<2x96xf32>
    %161 = math.exp %160 : vector<2x96xf32>
    %cst_50 = arith.constant 1.000000e+00 : f32
    %162 = vector.broadcast %cst_50 : f32 to vector<2x96xf32>
    %163 = arith.addf %162, %161 : vector<2x96xf32>
    %164 = arith.divf %162, %163 : vector<2x96xf32>
    %165 = vector.extract_strided_slice %158 {offsets = [0, 96], sizes = [2, 32], strides = [1, 1]} : vector<2x128xf32> to vector<2x32xf32>
    %166 = math.tanh %165 : vector<2x32xf32>
    %167 = vector.extract_strided_slice %164 {offsets = [0, 0], sizes = [2, 32], strides = [1, 1]} : vector<2x96xf32> to vector<2x32xf32>
    %168 = vector.extract_strided_slice %164 {offsets = [0, 32], sizes = [2, 32], strides = [1, 1]} : vector<2x96xf32> to vector<2x32xf32>
    %169 = vector.extract_strided_slice %164 {offsets = [0, 64], sizes = [2, 32], strides = [1, 1]} : vector<2x96xf32> to vector<2x32xf32>
    %170 = arith.mulf %168, %155 : vector<2x32xf32>
    %171 = arith.mulf %167, %166 : vector<2x32xf32>
    %172 = arith.addf %170, %171 : vector<2x32xf32>
    %173 = math.tanh %172 : vector<2x32xf32>
    %174 = arith.mulf %169, %173 : vector<2x32xf32>
    %175 = vector.extract_strided_slice %153 {offsets = [2, 0], sizes = [2, 128], strides = [1, 1]} : vector<4x128xf32> to vector<2x128xf32>
    %cst_51 = arith.constant dense<0.000000e+00> : vector<2x128xf32>
    %176 = tpu.matmul %174, %149, %cst_51 {dimension_numbers = #tpu.dot_dimension_numbers<[1], [0], [0], [1], [0, 0, 1, 1], [], []>} : vector<2x32xf32>, vector<32x128xf32>, vector<2x128xf32> -> vector<2x128xf32>
    %177 = arith.addf %175, %176 : vector<2x128xf32>
    %178 = vector.extract_strided_slice %177 {offsets = [0, 0], sizes = [2, 96], strides = [1, 1]} : vector<2x128xf32> to vector<2x96xf32>
    %179 = arith.negf %178 : vector<2x96xf32>
    %180 = math.exp %179 : vector<2x96xf32>
    %cst_52 = arith.constant 1.000000e+00 : f32
    %181 = vector.broadcast %cst_52 : f32 to vector<2x96xf32>
    %182 = arith.addf %181, %180 : vector<2x96xf32>
    %183 = arith.divf %181, %182 : vector<2x96xf32>
    %184 = vector.extract_strided_slice %177 {offsets = [0, 96], sizes = [2, 32], strides = [1, 1]} : vector<2x128xf32> to vector<2x32xf32>
    %185 = math.tanh %184 : vector<2x32xf32>
    %186 = vector.extract_strided_slice %183 {offsets = [0, 0], sizes = [2, 32], strides = [1, 1]} : vector<2x96xf32> to vector<2x32xf32>
    %187 = vector.extract_strided_slice %183 {offsets = [0, 32], sizes = [2, 32], strides = [1, 1]} : vector<2x96xf32> to vector<2x32xf32>
    %188 = vector.extract_strided_slice %183 {offsets = [0, 64], sizes = [2, 32], strides = [1, 1]} : vector<2x96xf32> to vector<2x32xf32>
    %189 = arith.mulf %187, %172 : vector<2x32xf32>
    %190 = arith.mulf %186, %185 : vector<2x32xf32>
    %191 = arith.addf %189, %190 : vector<2x32xf32>
    %192 = math.tanh %191 : vector<2x32xf32>
    %193 = arith.mulf %188, %192 : vector<2x32xf32>
    %194 = vector.extract_strided_slice %146 {offsets = [0, 0], sizes = [1, 32], strides = [1, 1]} : vector<2x32xf32> to vector<1x32xf32>
    %195 = vector.extract_strided_slice %193 {offsets = [0, 0], sizes = [1, 32], strides = [1, 1]} : vector<2x32xf32> to vector<1x32xf32>
    %196 = tpu.concatenate %194, %195 in 0 : vector<1x32xf32>, vector<1x32xf32> -> vector<2x32xf32>
    %c0_53 = arith.constant 0 : index
    %c0_54 = arith.constant 0 : index
    %197 = vector.load %arg11[%c0_53, %c0_54] : memref<64x128xf32, #tpu.memory_space<vmem>>, vector<32x128xf32>
    %cst_55 = arith.constant dense<0.000000e+00> : vector<2x128xf32>
    %198 = tpu.matmul %196, %197, %cst_55 {dimension_numbers = #tpu.dot_dimension_numbers<[1], [0], [0], [1], [0, 0, 1, 1], [], []>} : vector<2x32xf32>, vector<32x128xf32>, vector<2x128xf32> -> vector<2x128xf32>
    %199 = vector.extract_strided_slice %146 {offsets = [1, 0], sizes = [1, 32], strides = [1, 1]} : vector<2x32xf32> to vector<1x32xf32>
    %200 = vector.extract_strided_slice %193 {offsets = [1, 0], sizes = [1, 32], strides = [1, 1]} : vector<2x32xf32> to vector<1x32xf32>
    %201 = tpu.concatenate %199, %200 in 0 : vector<1x32xf32>, vector<1x32xf32> -> vector<2x32xf32>
    %c32 = arith.constant 32 : index
    %c0_56 = arith.constant 0 : index
    %202 = vector.load %arg11[%c32, %c0_56] : memref<64x128xf32, #tpu.memory_space<vmem>>, vector<32x128xf32>
    %cst_57 = arith.constant dense<0.000000e+00> : vector<2x128xf32>
    %203 = tpu.matmul %201, %202, %cst_57 {dimension_numbers = #tpu.dot_dimension_numbers<[1], [0], [0], [1], [0, 0, 1, 1], [], []>} : vector<2x32xf32>, vector<32x128xf32>, vector<2x128xf32> -> vector<2x128xf32>
    %204 = arith.addf %198, %203 : vector<2x128xf32>
    %c0_58 = arith.constant 0 : index
    %c0_59 = arith.constant 0 : index
    %205 = vector.load %arg12[%c0_58, %c0_59] : memref<1x128xf32, #tpu.memory_space<vmem>>, vector<1x128xf32>
    %206 = vector.broadcast %205 : vector<1x128xf32> to vector<2x128xf32>
    %207 = arith.addf %204, %206 : vector<2x128xf32>
    %c0_60 = arith.constant 0 : index
    %c0_61 = arith.constant 0 : index
    %208 = vector.load %arg13[%c0_60, %c0_61] : memref<2x128xf32, #tpu.memory_space<vmem>>, vector<2x128xf32>
    tpu.vector_store %arg13[%c0_60, %c0_61], %207 {strides = array<i32>} : memref<2x128xf32, #tpu.memory_space<vmem>>, vector<2x128xf32>,
    return
  }
}

</mosaic_0001>

<llo_original>
// kernel: conv_lstm_forward.1
$region0: #{conv_lstm_forward.1}
  #allocation0 [shape = 'u32[]', space=smem, size = 0x4, offset = 0x4, fixed_abs, tag = 'smem constant byte address 0x4 - core index']
  #allocation1 [shape = 'u32[144,128]{1,0:T(1,128)}', space=vmem, size = 0x12000, scoped, tag = 'internal scratch']
  %s0 = inlined_call_operand.vmem [shape: f32[2,16,4], index: 0, kind: input, shape index: {}]
  %s1 = inlined_call_operand.vmem [shape: f32[12,8], index: 1, kind: input, shape index: {}]
  %s2 = inlined_call_operand.vmem [shape: f32[1,8], index: 2, kind: input, shape index: {}]
  %s3 = inlined_call_operand.vmem [shape: f32[24,16], index: 3, kind: input, shape index: {}]
  %s4 = inlined_call_operand.vmem [shape: f32[1,16], index: 4, kind: input, shape index: {}]
  %s5 = inlined_call_operand.vmem [shape: f32[16,128], index: 5, kind: input, shape index: {}]
  %s6 = inlined_call_operand.vmem [shape: f32[32,128], index: 6, kind: input, shape index: {}]
  %s7 = inlined_call_operand.vmem [shape: f32[1,128], index: 7, kind: input, shape index: {}]
  %s8 = inlined_call_operand.vmem [shape: f32[32,128], index: 8, kind: input, shape index: {}]
  %s9 = inlined_call_operand.vmem [shape: f32[32,128], index: 9, kind: input, shape index: {}]
  %s10 = inlined_call_operand.vmem [shape: f32[1,128], index: 10, kind: input, shape index: {}]
  %s11 = inlined_call_operand.vmem [shape: f32[64,128], index: 11, kind: input, shape index: {}]
  %s12 = inlined_call_operand.vmem [shape: f32[1,128], index: 12, kind: input, shape index: {}]
  %s13 = inlined_call_operand.vmem [shape: f32[2,128], index: 13, kind: output, shape index: {}]
  %s14 = sld [smem:[#allocation0]]
  $region62: #{conv_lstm_forward.1} parent=0
    _
  %s16 = ssub.s32 1, %s14
  %s17 = scalar_select 0, %s16, %s14
  // Predicated region
  $region2: #{conv_lstm_forward.1} parent=0 // pred_check
    _
  $region3: #{conv_lstm_forward.1} parent=0 // pred_check_branch
    %19 = sbr.rel (0) target = $region5
  $region4: #{conv_lstm_forward.1} parent=0 // pred_region
    _
  $region5: #{conv_lstm_forward.1} parent=0 // pred_fallthru
    _
  // Predicated region
  $region6: #{conv_lstm_forward.1} parent=0 // pred_check
    _
  $region7: #{conv_lstm_forward.1} parent=0 // pred_check_branch
    %21 = sbr.rel (0) target = $region9
  $region8: #{conv_lstm_forward.1} parent=0 // pred_region
    _
  $region9: #{conv_lstm_forward.1} parent=0 // pred_fallthru
    _
  // Predicated region
  $region10: #{conv_lstm_forward.1} parent=0 // pred_check
    _
  $region11: #{conv_lstm_forward.1} parent=0 // pred_check_branch
    %23 = sbr.rel (0) target = $region13
  $region12: #{conv_lstm_forward.1} parent=0 // pred_region
    _
  $region13: #{conv_lstm_forward.1} parent=0 // pred_fallthru
    _
  // Predicated region
  $region14: #{conv_lstm_forward.1} parent=0 // pred_check
    _
  $region15: #{conv_lstm_forward.1} parent=0 // pred_check_branch
    %25 = sbr.rel (0) target = $region17
  $region16: #{conv_lstm_forward.1} parent=0 // pred_region
    _
  $region17: #{conv_lstm_forward.1} parent=0 // pred_fallthru
    _
  // Predicated region
  $region18: #{conv_lstm_forward.1} parent=0 // pred_check
    _
  $region19: #{conv_lstm_forward.1} parent=0 // pred_check_branch
    %27 = sbr.rel (0) target = $region21
  $region20: #{conv_lstm_forward.1} parent=0 // pred_region
    _
  $region21: #{conv_lstm_forward.1} parent=0 // pred_fallthru
    _
  // Predicated region
  $region22: #{conv_lstm_forward.1} parent=0 // pred_check
    _
  $region23: #{conv_lstm_forward.1} parent=0 // pred_check_branch
    %29 = sbr.rel (0) target = $region25
  $region24: #{conv_lstm_forward.1} parent=0 // pred_region
    _
  $region25: #{conv_lstm_forward.1} parent=0 // pred_fallthru
    _
  // Predicated region
  $region26: #{conv_lstm_forward.1} parent=0 // pred_check
    _
  $region27: #{conv_lstm_forward.1} parent=0 // pred_check_branch
    %31 = sbr.rel (0) target = $region29
  $region28: #{conv_lstm_forward.1} parent=0 // pred_region
    _
  $region29: #{conv_lstm_forward.1} parent=0 // pred_fallthru
    _
  // Predicated region
  $region30: #{conv_lstm_forward.1} parent=0 // pred_check
    _
  $region31: #{conv_lstm_forward.1} parent=0 // pred_check_branch
    %33 = sbr.rel (0) target = $region33
  $region32: #{conv_lstm_forward.1} parent=0 // pred_region
    _
  $region33: #{conv_lstm_forward.1} parent=0 // pred_fallthru
    _
  // Predicated region
  $region34: #{conv_lstm_forward.1} parent=0 // pred_check
    _
  $region35: #{conv_lstm_forward.1} parent=0 // pred_check_branch
    %35 = sbr.rel (0) target = $region37
  $region36: #{conv_lstm_forward.1} parent=0 // pred_region
    _
  $region37: #{conv_lstm_forward.1} parent=0 // pred_fallthru
    _
  // Predicated region
  $region38: #{conv_lstm_forward.1} parent=0 // pred_check
    _
  $region39: #{conv_lstm_forward.1} parent=0 // pred_check_branch
    %37 = sbr.rel (0) target = $region41
  $region40: #{conv_lstm_forward.1} parent=0 // pred_region
    _
  $region41: #{conv_lstm_forward.1} parent=0 // pred_fallthru
    _
  // Predicated region
  $region42: #{conv_lstm_forward.1} parent=0 // pred_check
    _
  $region43: #{conv_lstm_forward.1} parent=0 // pred_check_branch
    %39 = sbr.rel (0) target = $region45
  $region44: #{conv_lstm_forward.1} parent=0 // pred_region
    _
  $region45: #{conv_lstm_forward.1} parent=0 // pred_fallthru
    _
  // Predicated region
  $region46: #{conv_lstm_forward.1} parent=0 // pred_check
    _
  $region47: #{conv_lstm_forward.1} parent=0 // pred_check_branch
    %41 = sbr.rel (0) target = $region49
  $region48: #{conv_lstm_forward.1} parent=0 // pred_region
    _
  $region49: #{conv_lstm_forward.1} parent=0 // pred_fallthru
    _
  // Predicated region
  $region50: #{conv_lstm_forward.1} parent=0 // pred_check
    _
  $region51: #{conv_lstm_forward.1} parent=0 // pred_check_branch
    %43 = sbr.rel (0) target = $region53
  $region52: #{conv_lstm_forward.1} parent=0 // pred_region
    _
  $region53: #{conv_lstm_forward.1} parent=0 // pred_fallthru
    _
  %v44 = vld [vmem:[%s0] sm:$0xff]
  %v45 = vld [vmem:[%s0 + $0x8] sm:$0xff]
  %v46 = vld [vmem:[%s1] sm:$0xff]
  %v47 = vld [vmem:[%s1 + $0x8] sm:$0xf]
  %v48 = vld [vmem:[%s2] sm:$0x1]
  %vm51 = vcmask 1046528
  %v52 = vrot.slane %v44, 1
  %v53 = vrot.slane %v45, 1
  %v54 = vsel %vm51, %v52, %v53
  %55 = vrot.lane.b32.xlu0 %v54, 4
  %v56 = vpop.permute.xlu0 %55
  %57 = vrot.lane.b32.xlu0 %v53, 4
  %v58 = vpop.permute.xlu0 %57
  %vm61 = vcmask 1045504
  %v62 = vrot.slane %v44, 2
  %v63 = vrot.slane %v45, 2
  %v64 = vsel %vm61, %v62, %v63
  %65 = vrot.lane.b32.xlu0 %v64, 8
  %v66 = vpop.permute.xlu0 %65
  %67 = vrot.lane.b32.xlu0 %v63, 8
  %v68 = vpop.permute.xlu0 %67
  %vm71 = vcmask 31744
  %v72 = vsel %vm71, %v44, %v56
  %v73 = vsel %vm71, %v45, %v58
  %vm74 = vcmask 64512
  %v75 = vsel %vm74, %v72, %v66
  %v76 = vsel %vm74, %v73, %v68
  %v78 = vlaneseq
  %v79 = vshrl.u32 %v78, 7
  %v80 = vsub.s32 0, %v79
  %v81 = vrot.slane %v48, %v80
  %vm83 = vcmask 97280
  %v85 = vsel %vm83, %v75, 0
  %v88 = vsel %vm83, %v76, 0
  %vm90 = vcmask 1043456
  %v92 = vsel %vm90, %v47, 0
  %94 = vmatprep.subr.mxu0 0.0
  %95 = vmatpush1.msra.mxu0 0.0
  %96 = vmatprep.subr.mxu0 0.0
  %97 = vmatpush1.msra.mxu0 0.0
  %98 = vmatprep.subr.mxu0 0.0
  %99 = vmatpush1.msra.mxu0 0.0
  %100 = vmatprep.subr.mxu0 0.0
  %101 = vmatpush1.msra.mxu0 0.0
  %102 = vmatprep.subr.mxu0 0.0
  %103 = vmatpush1.msra.mxu0 0.0
  %104 = vmatprep.subr.mxu0 0.0
  %105 = vmatpush1.msra.mxu0 0.0
  %106 = vmatprep.subr.mxu0 0.0
  %107 = vmatpush1.msra.mxu0 0.0
  %108 = vmatprep.subr.mxu0 0.0
  %109 = vmatpush1.msra.mxu0 0.0
  %110 = vmatprep.subr.mxu0 0.0
  %111 = vmatpush1.msra.mxu0 0.0
  %112 = vmatprep.subr.mxu0 0.0
  %113 = vmatpush1.msra.mxu0 0.0
  %114 = vmatprep.subr.mxu0 0.0
  %115 = vmatpush1.msra.mxu0 0.0
  %116 = vmatprep.subr.mxu0 0.0
  %117 = vmatpush1.msra.mxu0 0.0
  %118 = vmatprep.subr.mxu0 0.0
  %119 = vmatpush1.msra.mxu0 0.0
  %120 = vmatprep.subr.mxu0 0.0
  %121 = vmatpush1.msra.mxu0 0.0
  %122 = vmatprep.subr.mxu0 0.0
  %123 = vmatpush1.msra.mxu0 %v92
  %124 = vmatprep.subr.mxu0 0.0
  %125 = vmatpush1.msra.mxu0 %v46
  %126 = vmatprep.subr.mxu0 0.0
  %127 = vmatpush2.msra.mxu0 0.0
  %128 = vmatprep.subr.mxu0 0.0
  %129 = vmatpush2.msra.mxu0 0.0
  %130 = vmatprep.subr.mxu0 0.0
  %131 = vmatpush2.msra.mxu0 0.0
  %132 = vmatprep.subr.mxu0 0.0
  %133 = vmatpush2.msra.mxu0 0.0
  %134 = vmatprep.subr.mxu0 0.0
  %135 = vmatpush2.msra.mxu0 0.0
  %136 = vmatprep.subr.mxu0 0.0
  %137 = vmatpush2.msra.mxu0 0.0
  %138 = vmatprep.subr.mxu0 0.0
  %139 = vmatpush2.msra.mxu0 0.0
  %140 = vmatprep.subr.mxu0 0.0
  %141 = vmatpush2.msra.mxu0 0.0
  %142 = vmatprep.subr.mxu0 0.0
  %143 = vmatpush2.msra.mxu0 0.0
  %144 = vmatprep.subr.mxu0 0.0
  %145 = vmatpush2.msra.mxu0 0.0
  %146 = vmatprep.subr.mxu0 0.0
  %147 = vmatpush2.msra.mxu0 0.0
  %148 = vmatprep.subr.mxu0 0.0
  %149 = vmatpush2.msra.mxu0 0.0
  %150 = vmatprep.subr.mxu0 0.0
  %151 = vmatpush2.msra.mxu0 0.0
  %152 = vmatprep.subr.mxu0 0.0
  %153 = vmatpush2.msra.mxu0 0.0
  %154 = vmatprep.subr.mxu0 0.0
  %155 = vmatpush2.msra.mxu0 0.0
  %156 = vmatprep.subr.mxu0 0.0
  %157 = vmatpush2.msra.mxu0 0.0
  %158 = vmatprep.mubr.f32.mxu0 0.0
  %159 = vmatmul.mubr.f32.gmra.mxu0 %v85
  %v160 = vpop.f32.mrf.mxu0
  %v161 = vadd.f32 %v81, %v160
  %v162 = vpop.f32.mrf.mxu0
  %163 = vmatprep.mubr.f32.mxu0 0.0
  %164 = vmatmul.mubr.f32.gmra.mxu0 %v88
  %v165 = vpop.f32.mrf.mxu0
  %v166 = vadd.f32 %v81, %v165
  %v167 = vpop.f32.mrf.mxu0
  %168 = vdwg.mxu0
  %v169 = vmax.f32 %v161, 0.0
  %v170 = vmax.f32 %v166, 0.0
  %v172 = vrot.slane %v169, 1
  %v174 = vrot.slane %v169, 2
  %v176 = vrot.slane %v169, 3
  %v179 = vrot.slane %v170, 4
  %v181 = vrot.slane %v170, 5
  %v183 = vrot.slane %v170, 6
  %vm185 = vcmask 1040384
  %v186 = vsel %vm185, %v169, %v172
  %vm187 = vcmask 1041408
  %v188 = vsel %vm187, %v186, %v174
  %vm189 = vcmask 1042432
  %v190 = vsel %vm189, %v188, %v176
  %v191 = vsel %vm90, %v190, %v179
  %vm192 = vcmask 1044480
  %v193 = vsel %vm192, %v191, %v181
  %v194 = vsel %vm61, %v193, %v183
  %v195 = vrot.slane %v169, 4
  %v197 = vrot.slane %v170, 7
  %v199 = vsel %vm185, %v172, %v174
  %v200 = vsel %vm187, %v199, %v176
  %v201 = vsel %vm189, %v200, %v195
  %v202 = vsel %vm90, %v201, %v181
  %v203 = vsel %vm192, %v202, %v183
  %v204 = vsel %vm61, %v203, %v197
  %v205 = vmax.f32 %v194, %v204
  %v206 = vld [vmem:[%s3] sm:$0xff]
  %v207 = vld [vmem:[%s3 + $0x8] sm:$0xff]
  %v208 = vld [vmem:[%s3 + $0x10] sm:$0xff]
  %v209 = vld [vmem:[%s4] sm:$0x1]
  %v211 = vrot.slane %v205, 1
  %212 = vrot.lane.b32.xlu0 %v211, 8
  %v213 = vpop.permute.xlu0 %212
  %v215 = vrot.slane %v205, 2
  %216 = vrot.lane.b32.xlu0 %v215, 16
  %v217 = vpop.permute.xlu0 %216
  %v219 = vsel %vm74, %v205, %v213
  %vm220 = vcmask 130048
  %v221 = vsel %vm220, %v219, %v217
  %v223 = vlaneseq
  %v224 = vshrl.u32 %v223, 7
  %v225 = vsub.s32 0, %v224
  %v226 = vrot.slane %v209, %v225
  %vm228 = vcmask 195584
  %v230 = vsel %vm228, %v221, 0
  %232 = vmatprep.subr.mxu0 0.0
  %233 = vmatpush1.msra.mxu0 0.0
  %234 = vmatprep.subr.mxu0 0.0
  %235 = vmatpush1.msra.mxu0 0.0
  %236 = vmatprep.subr.mxu0 0.0
  %237 = vmatpush1.msra.mxu0 0.0
  %238 = vmatprep.subr.mxu0 0.0
  %239 = vmatpush1.msra.mxu0 0.0
  %240 = vmatprep.subr.mxu0 0.0
  %241 = vmatpush1.msra.mxu0 0.0
  %242 = vmatprep.subr.mxu0 0.0
  %243 = vmatpush1.msra.mxu0 0.0
  %244 = vmatprep.subr.mxu0 0.0
  %245 = vmatpush1.msra.mxu0 0.0
  %246 = vmatprep.subr.mxu0 0.0
  %247 = vmatpush1.msra.mxu0 0.0
  %248 = vmatprep.subr.mxu0 0.0
  %249 = vmatpush1.msra.mxu0 0.0
  %250 = vmatprep.subr.mxu0 0.0
  %251 = vmatpush1.msra.mxu0 0.0
  %252 = vmatprep.subr.mxu0 0.0
  %253 = vmatpush1.msra.mxu0 0.0
  %254 = vmatprep.subr.mxu0 0.0
  %255 = vmatpush1.msra.mxu0 0.0
  %256 = vmatprep.subr.mxu0 0.0
  %257 = vmatpush1.msra.mxu0 0.0
  %258 = vmatprep.subr.mxu0 0.0
  %259 = vmatpush1.msra.mxu0 %v208
  %260 = vmatprep.subr.mxu0 0.0
  %261 = vmatpush1.msra.mxu0 %v207
  %262 = vmatprep.subr.mxu0 0.0
  %263 = vmatpush1.msra.mxu0 %v206
  %264 = vmatprep.subr.mxu0 0.0
  %265 = vmatpush2.msra.mxu0 0.0
  %266 = vmatprep.subr.mxu0 0.0
  %267 = vmatpush2.msra.mxu0 0.0
  %268 = vmatprep.subr.mxu0 0.0
  %269 = vmatpush2.msra.mxu0 0.0
  %270 = vmatprep.subr.mxu0 0.0
  %271 = vmatpush2.msra.mxu0 0.0
  %272 = vmatprep.subr.mxu0 0.0
  %273 = vmatpush2.msra.mxu0 0.0
  %274 = vmatprep.subr.mxu0 0.0
  %275 = vmatpush2.msra.mxu0 0.0
  %276 = vmatprep.subr.mxu0 0.0
  %277 = vmatpush2.msra.mxu0 0.0
  %278 = vmatprep.subr.mxu0 0.0
  %279 = vmatpush2.msra.mxu0 0.0
  %280 = vmatprep.subr.mxu0 0.0
  %281 = vmatpush2.msra.mxu0 0.0
  %282 = vmatprep.subr.mxu0 0.0
  %283 = vmatpush2.msra.mxu0 0.0
  %284 = vmatprep.subr.mxu0 0.0
  %285 = vmatpush2.msra.mxu0 0.0
  %286 = vmatprep.subr.mxu0 0.0
  %287 = vmatpush2.msra.mxu0 0.0
  %288 = vmatprep.subr.mxu0 0.0
  %289 = vmatpush2.msra.mxu0 0.0
  %290 = vmatprep.subr.mxu0 0.0
  %291 = vmatpush2.msra.mxu0 0.0
  %292 = vmatprep.subr.mxu0 0.0
  %293 = vmatpush2.msra.mxu0 0.0
  %294 = vmatprep.subr.mxu0 0.0
  %295 = vmatpush2.msra.mxu0 0.0
  %296 = vmatprep.mubr.f32.mxu0 0.0
  %297 = vmatmul.mubr.f32.gmra.mxu0 %v230
  %v298 = vpop.f32.mrf.mxu0
  %v299 = vadd.f32 %v226, %v298
  %v300 = vpop.f32.mrf.mxu0
  %301 = vdwg.mxu0
  %v302 = vmax.f32 %v299, 0.0
  %v304 = vrot.slane %v302, 1
  %v306 = vsel %vm185, %v302, %v304
  %v307 = vrot.slane %v302, 2
  %v309 = vsel %vm185, %v304, %v307
  %v310 = vmax.f32 %v306, %v309
  %s311 = scalar_lea.vmem %s0, 16
  %v312 = vld [vmem:[%s311] sm:$0xff]
  %v313 = vld [vmem:[%s311 + $0x8] sm:$0xff]
  %v316 = vrot.slane %v312, 1
  %v317 = vrot.slane %v313, 1
  %v318 = vsel %vm51, %v316, %v317
  %319 = vrot.lane.b32.xlu0 %v318, 4
  %v320 = vpop.permute.xlu0 %319
  %321 = vrot.lane.b32.xlu0 %v317, 4
  %v322 = vpop.permute.xlu0 %321
  %v325 = vrot.slane %v312, 2
  %v326 = vrot.slane %v313, 2
  %v327 = vsel %vm61, %v325, %v326
  %328 = vrot.lane.b32.xlu0 %v327, 8
  %v329 = vpop.permute.xlu0 %328
  %330 = vrot.lane.b32.xlu0 %v326, 8
  %v331 = vpop.permute.xlu0 %330
  %v334 = vsel %vm71, %v312, %v320
  %v335 = vsel %vm71, %v313, %v322
  %v336 = vsel %vm74, %v334, %v329
  %v337 = vsel %vm74, %v335, %v331
  %v339 = vsel %vm83, %v336, 0
  %v342 = vsel %vm83, %v337, 0
  %344 = vmatprep.subr.mxu0 0.0
  %345 = vmatpush1.msra.mxu0 0.0
  %346 = vmatprep.subr.mxu0 0.0
  %347 = vmatpush1.msra.mxu0 0.0
  %348 = vmatprep.subr.mxu0 0.0
  %349 = vmatpush1.msra.mxu0 0.0
  %350 = vmatprep.subr.mxu0 0.0
  %351 = vmatpush1.msra.mxu0 0.0
  %352 = vmatprep.subr.mxu0 0.0
  %353 = vmatpush1.msra.mxu0 0.0
  %354 = vmatprep.subr.mxu0 0.0
  %355 = vmatpush1.msra.mxu0 0.0
  %356 = vmatprep.subr.mxu0 0.0
  %357 = vmatpush1.msra.mxu0 0.0
  %358 = vmatprep.subr.mxu0 0.0
  %359 = vmatpush1.msra.mxu0 0.0
  %360 = vmatprep.subr.mxu0 0.0
  %361 = vmatpush1.msra.mxu0 0.0
  %362 = vmatprep.subr.mxu0 0.0
  %363 = vmatpush1.msra.mxu0 0.0
  %364 = vmatprep.subr.mxu0 0.0
  %365 = vmatpush1.msra.mxu0 0.0
  %366 = vmatprep.subr.mxu0 0.0
  %367 = vmatpush1.msra.mxu0 0.0
  %368 = vmatprep.subr.mxu0 0.0
  %369 = vmatpush1.msra.mxu0 0.0
  %370 = vmatprep.subr.mxu0 0.0
  %371 = vmatpush1.msra.mxu0 0.0
  %372 = vmatprep.subr.mxu0 0.0
  %373 = vmatpush1.msra.mxu0 %v92
  %374 = vmatprep.subr.mxu0 0.0
  %375 = vmatpush1.msra.mxu0 %v46
  %376 = vmatprep.subr.mxu0 0.0
  %377 = vmatpush2.msra.mxu0 0.0
  %378 = vmatprep.subr.mxu0 0.0
  %379 = vmatpush2.msra.mxu0 0.0
  %380 = vmatprep.subr.mxu0 0.0
  %381 = vmatpush2.msra.mxu0 0.0
  %382 = vmatprep.subr.mxu0 0.0
  %383 = vmatpush2.msra.mxu0 0.0
  %384 = vmatprep.subr.mxu0 0.0
  %385 = vmatpush2.msra.mxu0 0.0
  %386 = vmatprep.subr.mxu0 0.0
  %387 = vmatpush2.msra.mxu0 0.0
  %388 = vmatprep.subr.mxu0 0.0
  %389 = vmatpush2.msra.mxu0 0.0
  %390 = vmatprep.subr.mxu0 0.0
  %391 = vmatpush2.msra.mxu0 0.0
  %392 = vmatprep.subr.mxu0 0.0
  %393 = vmatpush2.msra.mxu0 0.0
  %394 = vmatprep.subr.mxu0 0.0
  %395 = vmatpush2.msra.mxu0 0.0
  %396 = vmatprep.subr.mxu0 0.0
  %397 = vmatpush2.msra.mxu0 0.0
  %398 = vmatprep.subr.mxu0 0.0
  %399 = vmatpush2.msra.mxu0 0.0
  %400 = vmatprep.subr.mxu0 0.0
  %401 = vmatpush2.msra.mxu0 0.0
  %402 = vmatprep.subr.mxu0 0.0
  %403 = vmatpush2.msra.mxu0 0.0
  %404 = vmatprep.subr.mxu0 0.0
  %405 = vmatpush2.msra.mxu0 0.0
  %406 = vmatprep.subr.mxu0 0.0
  %407 = vmatpush2.msra.mxu0 0.0
  %408 = vmatprep.mubr.f32.mxu0 0.0
  %409 = vmatmul.mubr.f32.gmra.mxu0 %v339
  %v410 = vpop.f32.mrf.mxu0
  %v411 = vadd.f32 %v81, %v410
  %v412 = vpop.f32.mrf.mxu0
  %413 = vmatprep.mubr.f32.mxu0 0.0
  %414 = vmatmul.mubr.f32.gmra.mxu0 %v342
  %v415 = vpop.f32.mrf.mxu0
  %v416 = vadd.f32 %v81, %v415
  %v417 = vpop.f32.mrf.mxu0
  %418 = vdwg.mxu0
  %v419 = vmax.f32 %v411, 0.0
  %v420 = vmax.f32 %v416, 0.0
  %v422 = vrot.slane %v419, 1
  %v424 = vrot.slane %v419, 2
  %v426 = vrot.slane %v419, 3
  %v429 = vrot.slane %v420, 4
  %v431 = vrot.slane %v420, 5
  %v433 = vrot.slane %v420, 6
  %v435 = vsel %vm185, %v419, %v422
  %v436 = vsel %vm187, %v435, %v424
  %v437 = vsel %vm189, %v436, %v426
  %v438 = vsel %vm90, %v437, %v429
  %v439 = vsel %vm192, %v438, %v431
  %v440 = vsel %vm61, %v439, %v433
  %v441 = vrot.slane %v419, 4
  %v443 = vrot.slane %v420, 7
  %v445 = vsel %vm185, %v422, %v424
  %v446 = vsel %vm187, %v445, %v426
  %v447 = vsel %vm189, %v446, %v441
  %v448 = vsel %vm90, %v447, %v431
  %v449 = vsel %vm192, %v448, %v433
  %v450 = vsel %vm61, %v449, %v443
  %v451 = vmax.f32 %v440, %v450
  %v453 = vrot.slane %v451, 1
  %454 = vrot.lane.b32.xlu0 %v453, 8
  %v455 = vpop.permute.xlu0 %454
  %v457 = vrot.slane %v451, 2
  %458 = vrot.lane.b32.xlu0 %v457, 16
  %v459 = vpop.permute.xlu0 %458
  %v461 = vsel %vm74, %v451, %v455
  %v462 = vsel %vm220, %v461, %v459
  %v464 = vsel %vm228, %v462, 0
  %466 = vmatprep.subr.mxu0 0.0
  %467 = vmatpush1.msra.mxu0 0.0
  %468 = vmatprep.subr.mxu0 0.0
  %469 = vmatpush1.msra.mxu0 0.0
  %470 = vmatprep.subr.mxu0 0.0
  %471 = vmatpush1.msra.mxu0 0.0
  %472 = vmatprep.subr.mxu0 0.0
  %473 = vmatpush1.msra.mxu0 0.0
  %474 = vmatprep.subr.mxu0 0.0
  %475 = vmatpush1.msra.mxu0 0.0
  %476 = vmatprep.subr.mxu0 0.0
  %477 = vmatpush1.msra.mxu0 0.0
  %478 = vmatprep.subr.mxu0 0.0
  %479 = vmatpush1.msra.mxu0 0.0
  %480 = vmatprep.subr.mxu0 0.0
  %481 = vmatpush1.msra.mxu0 0.0
  %482 = vmatprep.subr.mxu0 0.0
  %483 = vmatpush1.msra.mxu0 0.0
  %484 = vmatprep.subr.mxu0 0.0
  %485 = vmatpush1.msra.mxu0 0.0
  %486 = vmatprep.subr.mxu0 0.0
  %487 = vmatpush1.msra.mxu0 0.0
  %488 = vmatprep.subr.mxu0 0.0
  %489 = vmatpush1.msra.mxu0 0.0
  %490 = vmatprep.subr.mxu0 0.0
  %491 = vmatpush1.msra.mxu0 0.0
  %492 = vmatprep.subr.mxu0 0.0
  %493 = vmatpush1.msra.mxu0 %v208
  %494 = vmatprep.subr.mxu0 0.0
  %495 = vmatpush1.msra.mxu0 %v207
  %496 = vmatprep.subr.mxu0 0.0
  %497 = vmatpush1.msra.mxu0 %v206
  %498 = vmatprep.subr.mxu0 0.0
  %499 = vmatpush2.msra.mxu0 0.0
  %500 = vmatprep.subr.mxu0 0.0
  %501 = vmatpush2.msra.mxu0 0.0
  %502 = vmatprep.subr.mxu0 0.0
  %503 = vmatpush2.msra.mxu0 0.0
  %504 = vmatprep.subr.mxu0 0.0
  %505 = vmatpush2.msra.mxu0 0.0
  %506 = vmatprep.subr.mxu0 0.0
  %507 = vmatpush2.msra.mxu0 0.0
  %508 = vmatprep.subr.mxu0 0.0
  %509 = vmatpush2.msra.mxu0 0.0
  %510 = vmatprep.subr.mxu0 0.0
  %511 = vmatpush2.msra.mxu0 0.0
  %512 = vmatprep.subr.mxu0 0.0
  %513 = vmatpush2.msra.mxu0 0.0
  %514 = vmatprep.subr.mxu0 0.0
  %515 = vmatpush2.msra.mxu0 0.0
  %516 = vmatprep.subr.mxu0 0.0
  %517 = vmatpush2.msra.mxu0 0.0
  %518 = vmatprep.subr.mxu0 0.0
  %519 = vmatpush2.msra.mxu0 0.0
  %520 = vmatprep.subr.mxu0 0.0
  %521 = vmatpush2.msra.mxu0 0.0
  %522 = vmatprep.subr.mxu0 0.0
  %523 = vmatpush2.msra.mxu0 0.0
  %524 = vmatprep.subr.mxu0 0.0
  %525 = vmatpush2.msra.mxu0 0.0
  %526 = vmatprep.subr.mxu0 0.0
  %527 = vmatpush2.msra.mxu0 0.0
  %528 = vmatprep.subr.mxu0 0.0
  %529 = vmatpush2.msra.mxu0 0.0
  %530 = vmatprep.mubr.f32.mxu0 0.0
  %531 = vmatmul.mubr.f32.gmra.mxu0 %v464
  %v532 = vpop.f32.mrf.mxu0
  %v533 = vadd.f32 %v226, %v532
  %v534 = vpop.f32.mrf.mxu0
  %535 = vdwg.mxu0
  %v536 = vmax.f32 %v533, 0.0
  %v538 = vrot.slane %v536, 1
  %v540 = vsel %vm185, %v536, %v538
  %v541 = vrot.slane %v536, 2
  %v543 = vsel %vm185, %v538, %v541
  %v544 = vmax.f32 %v540, %v543
  %v546 = vrot.slane %v544, 7
  %v549 = vrot.slane %v310, 7
  %v551 = vrot.slane %v544, 6
  %v553 = vsel %vm185, %v310, %v546
  %v554 = vsel %vm187, %v553, %v549
  %v555 = vsel %vm189, %v554, %v551
  %v556 = vld [vmem:[%s5] sm:$0xff]
  %v557 = vld [vmem:[%s5 + $0x8] sm:$0xff]
  %v558 = vld [vmem:[%s6] sm:$0xff]
  %v559 = vld [vmem:[%s6 + $0x8] sm:$0xff]
  %v560 = vld [vmem:[%s6 + $0x10] sm:$0xff]
  %v561 = vld [vmem:[%s6 + $0x18] sm:$0xff]
  %v562 = vld [vmem:[%s7] sm:$0x1]
  %v564 = vlaneseq
  %v565 = vshrl.u32 %v564, 7
  %v566 = vsub.s32 0, %v565
  %v567 = vrot.slane %v562, %v566
  %v570 = vsel %vm220, %v555, 0
  %572 = vmatprep.subr.mxu0 0.0
  %573 = vmatpush1.msra.mxu0 0.0
  %574 = vmatprep.subr.mxu0 0.0
  %575 = vmatpush1.msra.mxu0 0.0
  %576 = vmatprep.subr.mxu0 0.0
  %577 = vmatpush1.msra.mxu0 0.0
  %578 = vmatprep.subr.mxu0 0.0
  %579 = vmatpush1.msra.mxu0 0.0
  %580 = vmatprep.subr.mxu0 0.0
  %581 = vmatpush1.msra.mxu0 0.0
  %582 = vmatprep.subr.mxu0 0.0
  %583 = vmatpush1.msra.mxu0 0.0
  %584 = vmatprep.subr.mxu0 0.0
  %585 = vmatpush1.msra.mxu0 0.0
  %586 = vmatprep.subr.mxu0 0.0
  %587 = vmatpush1.msra.mxu0 0.0
  %588 = vmatprep.subr.mxu0 0.0
  %589 = vmatpush1.msra.mxu0 0.0
  %590 = vmatprep.subr.mxu0 0.0
  %591 = vmatpush1.msra.mxu0 0.0
  %592 = vmatprep.subr.mxu0 0.0
  %593 = vmatpush1.msra.mxu0 0.0
  %594 = vmatprep.subr.mxu0 0.0
  %595 = vmatpush1.msra.mxu0 0.0
  %596 = vmatprep.subr.mxu0 0.0
  %597 = vmatpush1.msra.mxu0 0.0
  %598 = vmatprep.subr.mxu0 0.0
  %599 = vmatpush1.msra.mxu0 0.0
  %600 = vmatprep.subr.mxu0 0.0
  %601 = vmatpush1.msra.mxu0 %v557
  %602 = vmatprep.subr.mxu0 0.0
  %603 = vmatpush1.msra.mxu0 %v556
  %604 = vmatprep.subr.mxu0 0.0
  %605 = vmatpush2.msra.mxu0 0.0
  %606 = vmatprep.subr.mxu0 0.0
  %607 = vmatpush2.msra.mxu0 0.0
  %608 = vmatprep.subr.mxu0 0.0
  %609 = vmatpush2.msra.mxu0 0.0
  %610 = vmatprep.subr.mxu0 0.0
  %611 = vmatpush2.msra.mxu0 0.0
  %612 = vmatprep.subr.mxu0 0.0
  %613 = vmatpush2.msra.mxu0 0.0
  %614 = vmatprep.subr.mxu0 0.0
  %615 = vmatpush2.msra.mxu0 0.0
  %616 = vmatprep.subr.mxu0 0.0
  %617 = vmatpush2.msra.mxu0 0.0
  %618 = vmatprep.subr.mxu0 0.0
  %619 = vmatpush2.msra.mxu0 0.0
  %620 = vmatprep.subr.mxu0 0.0
  %621 = vmatpush2.msra.mxu0 0.0
  %622 = vmatprep.subr.mxu0 0.0
  %623 = vmatpush2.msra.mxu0 0.0
  %624 = vmatprep.subr.mxu0 0.0
  %625 = vmatpush2.msra.mxu0 0.0
  %626 = vmatprep.subr.mxu0 0.0
  %627 = vmatpush2.msra.mxu0 0.0
  %628 = vmatprep.subr.mxu0 0.0
  %629 = vmatpush2.msra.mxu0 0.0
  %630 = vmatprep.subr.mxu0 0.0
  %631 = vmatpush2.msra.mxu0 0.0
  %632 = vmatprep.subr.mxu0 0.0
  %633 = vmatpush2.msra.mxu0 0.0
  %634 = vmatprep.subr.mxu0 0.0
  %635 = vmatpush2.msra.mxu0 0.0
  %636 = vmatprep.mubr.f32.mxu0 0.0
  %637 = vmatmul.mubr.f32.gmra.mxu0 %v570
  %v638 = vpop.f32.mrf.mxu0
  %v639 = vadd.f32 %v567, %v638
  %v640 = vpop.f32.mrf.mxu0
  %641 = vdwg.mxu0
  %vm642 = vcmask 261120
  %v644 = vsel %vm642, 0.0, 0
  %646 = vmatprep.subr.mxu0 0.0
  %647 = vmatpush1.msra.mxu0 0.0
  %648 = vmatprep.subr.mxu0 0.0
  %649 = vmatpush1.msra.mxu0 0.0
  %650 = vmatprep.subr.mxu0 0.0
  %651 = vmatpush1.msra.mxu0 0.0
  %652 = vmatprep.subr.mxu0 0.0
  %653 = vmatpush1.msra.mxu0 0.0
  %654 = vmatprep.subr.mxu0 0.0
  %655 = vmatpush1.msra.mxu0 0.0
  %656 = vmatprep.subr.mxu0 0.0
  %657 = vmatpush1.msra.mxu0 0.0
  %658 = vmatprep.subr.mxu0 0.0
  %659 = vmatpush1.msra.mxu0 0.0
  %660 = vmatprep.subr.mxu0 0.0
  %661 = vmatpush1.msra.mxu0 0.0
  %662 = vmatprep.subr.mxu0 0.0
  %663 = vmatpush1.msra.mxu0 0.0
  %664 = vmatprep.subr.mxu0 0.0
  %665 = vmatpush1.msra.mxu0 0.0
  %666 = vmatprep.subr.mxu0 0.0
  %667 = vmatpush1.msra.mxu0 0.0
  %668 = vmatprep.subr.mxu0 0.0
  %669 = vmatpush1.msra.mxu0 0.0
  %670 = vmatprep.subr.mxu0 0.0
  %671 = vmatpush1.msra.mxu0 %v561
  %672 = vmatprep.subr.mxu0 0.0
  %673 = vmatpush1.msra.mxu0 %v560
  %674 = vmatprep.subr.mxu0 0.0
  %675 = vmatpush1.msra.mxu0 %v559
  %676 = vmatprep.subr.mxu0 0.0
  %677 = vmatpush1.msra.mxu0 %v558
  %678 = vmatprep.subr.mxu0 0.0
  %679 = vmatpush2.msra.mxu0 0.0
  %680 = vmatprep.subr.mxu0 0.0
  %681 = vmatpush2.msra.mxu0 0.0
  %682 = vmatprep.subr.mxu0 0.0
  %683 = vmatpush2.msra.mxu0 0.0
  %684 = vmatprep.subr.mxu0 0.0
  %685 = vmatpush2.msra.mxu0 0.0
  %686 = vmatprep.subr.mxu0 0.0
  %687 = vmatpush2.msra.mxu0 0.0
  %688 = vmatprep.subr.mxu0 0.0
  %689 = vmatpush2.msra.mxu0 0.0
  %690 = vmatprep.subr.mxu0 0.0
  %691 = vmatpush2.msra.mxu0 0.0
  %692 = vmatprep.subr.mxu0 0.0
  %693 = vmatpush2.msra.mxu0 0.0
  %694 = vmatprep.subr.mxu0 0.0
  %695 = vmatpush2.msra.mxu0 0.0
  %696 = vmatprep.subr.mxu0 0.0
  %697 = vmatpush2.msra.mxu0 0.0
  %698 = vmatprep.subr.mxu0 0.0
  %699 = vmatpush2.msra.mxu0 0.0
  %700 = vmatprep.subr.mxu0 0.0
  %701 = vmatpush2.msra.mxu0 0.0
  %702 = vmatprep.subr.mxu0 0.0
  %703 = vmatpush2.msra.mxu0 0.0
  %704 = vmatprep.subr.mxu0 0.0
  %705 = vmatpush2.msra.mxu0 0.0
  %706 = vmatprep.subr.mxu0 0.0
  %707 = vmatpush2.msra.mxu0 0.0
  %708 = vmatprep.subr.mxu0 0.0
  %709 = vmatpush2.msra.mxu0 0.0
  %710 = vmatprep.mubr.f32.mxu0 0.0
  %711 = vmatmul.mubr.f32.gmra.mxu0 %v644
  %v712 = vpop.f32.mrf.mxu0
  %v713 = vadd.f32 0.0, %v712
  %v714 = vpop.f32.mrf.mxu0
  %715 = vdwg.mxu0
  %v716 = vadd.f32 %v639, %v713
  %v717 = vxor.u32 %v716, 2147483648
  %v718 = vmul.f32 %v717, 1.442695
  %v719 = vpow.pop %v718
  %v720 = vadd.f32 %v719, 1.0
  %v721 = vrcp.pop %v720
  %v722 = vmul.f32 1.0, %v721
  %v723 = vtanh.pop %v716
  %v724 = vmul.f32 %v722, 0.0
  %726 = vrot.lane.b32.xlu0 %v723, 32
  %v727 = vpop.permute.xlu0 %726
  %v729 = vmul.f32 %v722, %v727
  %731 = vrot.lane.b32.xlu0 %v729, 32
  %v732 = vpop.permute.xlu0 %731
  %v734 = vadd.f32 %v724, %v732
  %v735 = vtanh.pop %v734
  %737 = vrot.lane.b32.xlu0 %v735, 32
  %v738 = vpop.permute.xlu0 %737
  %v740 = vmul.f32 %v722, %v738
  %742 = vrot.lane.b32.xlu0 %v740, 64
  %v743 = vpop.permute.xlu0 %742
  %v744 = vsel %vm642, %v743, 0
  %746 = vmatprep.subr.mxu0 0.0
  %747 = vmatpush1.msra.mxu0 0.0
  %748 = vmatprep.subr.mxu0 0.0
  %749 = vmatpush1.msra.mxu0 0.0
  %750 = vmatprep.subr.mxu0 0.0
  %751 = vmatpush1.msra.mxu0 0.0
  %752 = vmatprep.subr.mxu0 0.0
  %753 = vmatpush1.msra.mxu0 0.0
  %754 = vmatprep.subr.mxu0 0.0
  %755 = vmatpush1.msra.mxu0 0.0
  %756 = vmatprep.subr.mxu0 0.0
  %757 = vmatpush1.msra.mxu0 0.0
  %758 = vmatprep.subr.mxu0 0.0
  %759 = vmatpush1.msra.mxu0 0.0
  %760 = vmatprep.subr.mxu0 0.0
  %761 = vmatpush1.msra.mxu0 0.0
  %762 = vmatprep.subr.mxu0 0.0
  %763 = vmatpush1.msra.mxu0 0.0
  %764 = vmatprep.subr.mxu0 0.0
  %765 = vmatpush1.msra.mxu0 0.0
  %766 = vmatprep.subr.mxu0 0.0
  %767 = vmatpush1.msra.mxu0 0.0
  %768 = vmatprep.subr.mxu0 0.0
  %769 = vmatpush1.msra.mxu0 0.0
  %770 = vmatprep.subr.mxu0 0.0
  %771 = vmatpush1.msra.mxu0 %v561
  %772 = vmatprep.subr.mxu0 0.0
  %773 = vmatpush1.msra.mxu0 %v560
  %774 = vmatprep.subr.mxu0 0.0
  %775 = vmatpush1.msra.mxu0 %v559
  %776 = vmatprep.subr.mxu0 0.0
  %777 = vmatpush1.msra.mxu0 %v558
  %778 = vmatprep.subr.mxu0 0.0
  %779 = vmatpush2.msra.mxu0 0.0
  %780 = vmatprep.subr.mxu0 0.0
  %781 = vmatpush2.msra.mxu0 0.0
  %782 = vmatprep.subr.mxu0 0.0
  %783 = vmatpush2.msra.mxu0 0.0
  %784 = vmatprep.subr.mxu0 0.0
  %785 = vmatpush2.msra.mxu0 0.0
  %786 = vmatprep.subr.mxu0 0.0
  %787 = vmatpush2.msra.mxu0 0.0
  %788 = vmatprep.subr.mxu0 0.0
  %789 = vmatpush2.msra.mxu0 0.0
  %790 = vmatprep.subr.mxu0 0.0
  %791 = vmatpush2.msra.mxu0 0.0
  %792 = vmatprep.subr.mxu0 0.0
  %793 = vmatpush2.msra.mxu0 0.0
  %794 = vmatprep.subr.mxu0 0.0
  %795 = vmatpush2.msra.mxu0 0.0
  %796 = vmatprep.subr.mxu0 0.0
  %797 = vmatpush2.msra.mxu0 0.0
  %798 = vmatprep.subr.mxu0 0.0
  %799 = vmatpush2.msra.mxu0 0.0
  %800 = vmatprep.subr.mxu0 0.0
  %801 = vmatpush2.msra.mxu0 0.0
  %802 = vmatprep.subr.mxu0 0.0
  %803 = vmatpush2.msra.mxu0 0.0
  %804 = vmatprep.subr.mxu0 0.0
  %805 = vmatpush2.msra.mxu0 0.0
  %806 = vmatprep.subr.mxu0 0.0
  %807 = vmatpush2.msra.mxu0 0.0
  %808 = vmatprep.subr.mxu0 0.0
  %809 = vmatpush2.msra.mxu0 0.0
  %810 = vmatprep.mubr.f32.mxu0 0.0
  %811 = vmatmul.mubr.f32.gmra.mxu0 %v744
  %v812 = vpop.f32.mrf.mxu0
  %v813 = vadd.f32 0.0, %v812
  %v814 = vpop.f32.mrf.mxu0
  %815 = vdwg.mxu0
  %v817 = vrot.slane %v813, 6
  %v819 = vadd.f32 %v639, %v817
  %v820 = vxor.u32 %v819, 2147483648
  %v821 = vmul.f32 %v820, 1.442695
  %v822 = vpow.pop %v821
  %v823 = vadd.f32 %v822, 1.0
  %v824 = vrcp.pop %v823
  %v825 = vmul.f32 1.0, %v824
  %v826 = vtanh.pop %v819
  %v828 = vrot.slane %v734, 6
  %v830 = vmul.f32 %v825, %v828
  %832 = vrot.lane.b32.xlu0 %v826, 32
  %v833 = vpop.permute.xlu0 %832
  %v835 = vmul.f32 %v825, %v833
  %837 = vrot.lane.b32.xlu0 %v835, 32
  %v838 = vpop.permute.xlu0 %837
  %v840 = vadd.f32 %v830, %v838
  %v841 = vtanh.pop %v840
  %843 = vrot.lane.b32.xlu0 %v841, 32
  %v844 = vpop.permute.xlu0 %843
  %v846 = vmul.f32 %v825, %v844
  %v847 = vsel %vm187, %v740, %v846
  %v848 = vld [vmem:[%s8] sm:$0xff]
  %v849 = vld [vmem:[%s8 + $0x8] sm:$0xff]
  %v850 = vld [vmem:[%s8 + $0x10] sm:$0xff]
  %v851 = vld [vmem:[%s8 + $0x18] sm:$0xff]
  %v852 = vld [vmem:[%s9] sm:$0xff]
  %v853 = vld [vmem:[%s9 + $0x8] sm:$0xff]
  %v854 = vld [vmem:[%s9 + $0x10] sm:$0xff]
  %v855 = vld [vmem:[%s9 + $0x18] sm:$0xff]
  %v856 = vld [vmem:[%s10] sm:$0x1]
  %v858 = vlaneseq
  %v859 = vshrl.u32 %v858, 7
  %v860 = vsub.s32 0, %v859
  %v861 = vrot.slane %v856, %v860
  %864 = vrot.lane.b32.xlu0 %v847, 64
  %v865 = vpop.permute.xlu0 %864
  %v866 = vsel %vm642, %v865, 0
  %868 = vmatprep.subr.mxu0 0.0
  %869 = vmatpush1.msra.mxu0 0.0
  %870 = vmatprep.subr.mxu0 0.0
  %871 = vmatpush1.msra.mxu0 0.0
  %872 = vmatprep.subr.mxu0 0.0
  %873 = vmatpush1.msra.mxu0 0.0
  %874 = vmatprep.subr.mxu0 0.0
  %875 = vmatpush1.msra.mxu0 0.0
  %876 = vmatprep.subr.mxu0 0.0
  %877 = vmatpush1.msra.mxu0 0.0
  %878 = vmatprep.subr.mxu0 0.0
  %879 = vmatpush1.msra.mxu0 0.0
  %880 = vmatprep.subr.mxu0 0.0
  %881 = vmatpush1.msra.mxu0 0.0
  %882 = vmatprep.subr.mxu0 0.0
  %883 = vmatpush1.msra.mxu0 0.0
  %884 = vmatprep.subr.mxu0 0.0
  %885 = vmatpush1.msra.mxu0 0.0
  %886 = vmatprep.subr.mxu0 0.0
  %887 = vmatpush1.msra.mxu0 0.0
  %888 = vmatprep.subr.mxu0 0.0
  %889 = vmatpush1.msra.mxu0 0.0
  %890 = vmatprep.subr.mxu0 0.0
  %891 = vmatpush1.msra.mxu0 0.0
  %892 = vmatprep.subr.mxu0 0.0
  %893 = vmatpush1.msra.mxu0 %v851
  %894 = vmatprep.subr.mxu0 0.0
  %895 = vmatpush1.msra.mxu0 %v850
  %896 = vmatprep.subr.mxu0 0.0
  %897 = vmatpush1.msra.mxu0 %v849
  %898 = vmatprep.subr.mxu0 0.0
  %899 = vmatpush1.msra.mxu0 %v848
  %900 = vmatprep.subr.mxu0 0.0
  %901 = vmatpush2.msra.mxu0 0.0
  %902 = vmatprep.subr.mxu0 0.0
  %903 = vmatpush2.msra.mxu0 0.0
  %904 = vmatprep.subr.mxu0 0.0
  %905 = vmatpush2.msra.mxu0 0.0
  %906 = vmatprep.subr.mxu0 0.0
  %907 = vmatpush2.msra.mxu0 0.0
  %908 = vmatprep.subr.mxu0 0.0
  %909 = vmatpush2.msra.mxu0 0.0
  %910 = vmatprep.subr.mxu0 0.0
  %911 = vmatpush2.msra.mxu0 0.0
  %912 = vmatprep.subr.mxu0 0.0
  %913 = vmatpush2.msra.mxu0 0.0
  %914 = vmatprep.subr.mxu0 0.0
  %915 = vmatpush2.msra.mxu0 0.0
  %916 = vmatprep.subr.mxu0 0.0
  %917 = vmatpush2.msra.mxu0 0.0
  %918 = vmatprep.subr.mxu0 0.0
  %919 = vmatpush2.msra.mxu0 0.0
  %920 = vmatprep.subr.mxu0 0.0
  %921 = vmatpush2.msra.mxu0 0.0
  %922 = vmatprep.subr.mxu0 0.0
  %923 = vmatpush2.msra.mxu0 0.0
  %924 = vmatprep.subr.mxu0 0.0
  %925 = vmatpush2.msra.mxu0 0.0
  %926 = vmatprep.subr.mxu0 0.0
  %927 = vmatpush2.msra.mxu0 0.0
  %928 = vmatprep.subr.mxu0 0.0
  %929 = vmatpush2.msra.mxu0 0.0
  %930 = vmatprep.subr.mxu0 0.0
  %931 = vmatpush2.msra.mxu0 0.0
  %932 = vmatprep.mubr.f32.mxu0 0.0
  %933 = vmatmul.mubr.f32.gmra.mxu0 %v866
  %v934 = vpop.f32.mrf.mxu0
  %v935 = vadd.f32 %v861, %v934
  %v936 = vpop.f32.mrf.mxu0
  %937 = vdwg.mxu0
  %938 = vmatprep.subr.mxu0 0.0
  %939 = vmatpush1.msra.mxu0 0.0
  %940 = vmatprep.subr.mxu0 0.0
  %941 = vmatpush1.msra.mxu0 0.0
  %942 = vmatprep.subr.mxu0 0.0
  %943 = vmatpush1.msra.mxu0 0.0
  %944 = vmatprep.subr.mxu0 0.0
  %945 = vmatpush1.msra.mxu0 0.0
  %946 = vmatprep.subr.mxu0 0.0
  %947 = vmatpush1.msra.mxu0 0.0
  %948 = vmatprep.subr.mxu0 0.0
  %949 = vmatpush1.msra.mxu0 0.0
  %950 = vmatprep.subr.mxu0 0.0
  %951 = vmatpush1.msra.mxu0 0.0
  %952 = vmatprep.subr.mxu0 0.0
  %953 = vmatpush1.msra.mxu0 0.0
  %954 = vmatprep.subr.mxu0 0.0
  %955 = vmatpush1.msra.mxu0 0.0
  %956 = vmatprep.subr.mxu0 0.0
  %957 = vmatpush1.msra.mxu0 0.0
  %958 = vmatprep.subr.mxu0 0.0
  %959 = vmatpush1.msra.mxu0 0.0
  %960 = vmatprep.subr.mxu0 0.0
  %961 = vmatpush1.msra.mxu0 0.0
  %962 = vmatprep.subr.mxu0 0.0
  %963 = vmatpush1.msra.mxu0 %v855
  %964 = vmatprep.subr.mxu0 0.0
  %965 = vmatpush1.msra.mxu0 %v854
  %966 = vmatprep.subr.mxu0 0.0
  %967 = vmatpush1.msra.mxu0 %v853
  %968 = vmatprep.subr.mxu0 0.0
  %969 = vmatpush1.msra.mxu0 %v852
  %970 = vmatprep.subr.mxu0 0.0
  %971 = vmatpush2.msra.mxu0 0.0
  %972 = vmatprep.subr.mxu0 0.0
  %973 = vmatpush2.msra.mxu0 0.0
  %974 = vmatprep.subr.mxu0 0.0
  %975 = vmatpush2.msra.mxu0 0.0
  %976 = vmatprep.subr.mxu0 0.0
  %977 = vmatpush2.msra.mxu0 0.0
  %978 = vmatprep.subr.mxu0 0.0
  %979 = vmatpush2.msra.mxu0 0.0
  %980 = vmatprep.subr.mxu0 0.0
  %981 = vmatpush2.msra.mxu0 0.0
  %982 = vmatprep.subr.mxu0 0.0
  %983 = vmatpush2.msra.mxu0 0.0
  %984 = vmatprep.subr.mxu0 0.0
  %985 = vmatpush2.msra.mxu0 0.0
  %986 = vmatprep.subr.mxu0 0.0
  %987 = vmatpush2.msra.mxu0 0.0
  %988 = vmatprep.subr.mxu0 0.0
  %989 = vmatpush2.msra.mxu0 0.0
  %990 = vmatprep.subr.mxu0 0.0
  %991 = vmatpush2.msra.mxu0 0.0
  %992 = vmatprep.subr.mxu0 0.0
  %993 = vmatpush2.msra.mxu0 0.0
  %994 = vmatprep.subr.mxu0 0.0
  %995 = vmatpush2.msra.mxu0 0.0
  %996 = vmatprep.subr.mxu0 0.0
  %997 = vmatpush2.msra.mxu0 0.0
  %998 = vmatprep.subr.mxu0 0.0
  %999 = vmatpush2.msra.mxu0 0.0
  %1000 = vmatprep.subr.mxu0 0.0
  %1001 = vmatpush2.msra.mxu0 0.0
  %1002 = vmatprep.mubr.f32.mxu0 0.0
  %1003 = vmatmul.mubr.f32.gmra.mxu0 %v644
  %v1004 = vpop.f32.mrf.mxu0
  %v1005 = vadd.f32 0.0, %v1004
  %v1006 = vpop.f32.mrf.mxu0
  %1007 = vdwg.mxu0
  %v1008 = vadd.f32 %v935, %v1005
  %v1009 = vxor.u32 %v1008, 2147483648
  %v1010 = vmul.f32 %v1009, 1.442695
  %v1011 = vpow.pop %v1010
  %v1012 = vadd.f32 %v1011, 1.0
  %v1013 = vrcp.pop %v1012
  %v1014 = vmul.f32 1.0, %v1013
  %v1015 = vtanh.pop %v1008
  %v1016 = vmul.f32 %v1014, 0.0
  %1018 = vrot.lane.b32.xlu0 %v1015, 32
  %v1019 = vpop.permute.xlu0 %1018
  %v1021 = vmul.f32 %v1014, %v1019
  %1023 = vrot.lane.b32.xlu0 %v1021, 32
  %v1024 = vpop.permute.xlu0 %1023
  %v1026 = vadd.f32 %v1016, %v1024
  %v1027 = vtanh.pop %v1026
  %1029 = vrot.lane.b32.xlu0 %v1027, 32
  %v1030 = vpop.permute.xlu0 %1029
  %v1032 = vmul.f32 %v1014, %v1030
  %1034 = vrot.lane.b32.xlu0 %v1032, 64
  %v1035 = vpop.permute.xlu0 %1034
  %v1036 = vsel %vm642, %v1035, 0
  %1038 = vmatprep.subr.mxu0 0.0
  %1039 = vmatpush1.msra.mxu0 0.0
  %1040 = vmatprep.subr.mxu0 0.0
  %1041 = vmatpush1.msra.mxu0 0.0
  %1042 = vmatprep.subr.mxu0 0.0
  %1043 = vmatpush1.msra.mxu0 0.0
  %1044 = vmatprep.subr.mxu0 0.0
  %1045 = vmatpush1.msra.mxu0 0.0
  %1046 = vmatprep.subr.mxu0 0.0
  %1047 = vmatpush1.msra.mxu0 0.0
  %1048 = vmatprep.subr.mxu0 0.0
  %1049 = vmatpush1.msra.mxu0 0.0
  %1050 = vmatprep.subr.mxu0 0.0
  %1051 = vmatpush1.msra.mxu0 0.0
  %1052 = vmatprep.subr.mxu0 0.0
  %1053 = vmatpush1.msra.mxu0 0.0
  %1054 = vmatprep.subr.mxu0 0.0
  %1055 = vmatpush1.msra.mxu0 0.0
  %1056 = vmatprep.subr.mxu0 0.0
  %1057 = vmatpush1.msra.mxu0 0.0
  %1058 = vmatprep.subr.mxu0 0.0
  %1059 = vmatpush1.msra.mxu0 0.0
  %1060 = vmatprep.subr.mxu0 0.0
  %1061 = vmatpush1.msra.mxu0 0.0
  %1062 = vmatprep.subr.mxu0 0.0
  %1063 = vmatpush1.msra.mxu0 %v855
  %1064 = vmatprep.subr.mxu0 0.0
  %1065 = vmatpush1.msra.mxu0 %v854
  %1066 = vmatprep.subr.mxu0 0.0
  %1067 = vmatpush1.msra.mxu0 %v853
  %1068 = vmatprep.subr.mxu0 0.0
  %1069 = vmatpush1.msra.mxu0 %v852
  %1070 = vmatprep.subr.mxu0 0.0
  %1071 = vmatpush2.msra.mxu0 0.0
  %1072 = vmatprep.subr.mxu0 0.0
  %1073 = vmatpush2.msra.mxu0 0.0
  %1074 = vmatprep.subr.mxu0 0.0
  %1075 = vmatpush2.msra.mxu0 0.0
  %1076 = vmatprep.subr.mxu0 0.0
  %1077 = vmatpush2.msra.mxu0 0.0
  %1078 = vmatprep.subr.mxu0 0.0
  %1079 = vmatpush2.msra.mxu0 0.0
  %1080 = vmatprep.subr.mxu0 0.0
  %1081 = vmatpush2.msra.mxu0 0.0
  %1082 = vmatprep.subr.mxu0 0.0
  %1083 = vmatpush2.msra.mxu0 0.0
  %1084 = vmatprep.subr.mxu0 0.0
  %1085 = vmatpush2.msra.mxu0 0.0
  %1086 = vmatprep.subr.mxu0 0.0
  %1087 = vmatpush2.msra.mxu0 0.0
  %1088 = vmatprep.subr.mxu0 0.0
  %1089 = vmatpush2.msra.mxu0 0.0
  %1090 = vmatprep.subr.mxu0 0.0
  %1091 = vmatpush2.msra.mxu0 0.0
  %1092 = vmatprep.subr.mxu0 0.0
  %1093 = vmatpush2.msra.mxu0 0.0
  %1094 = vmatprep.subr.mxu0 0.0
  %1095 = vmatpush2.msra.mxu0 0.0
  %1096 = vmatprep.subr.mxu0 0.0
  %1097 = vmatpush2.msra.mxu0 0.0
  %1098 = vmatprep.subr.mxu0 0.0
  %1099 = vmatpush2.msra.mxu0 0.0
  %1100 = vmatprep.subr.mxu0 0.0
  %1101 = vmatpush2.msra.mxu0 0.0
  %1102 = vmatprep.mubr.f32.mxu0 0.0
  %1103 = vmatmul.mubr.f32.gmra.mxu0 %v1036
  %v1104 = vpop.f32.mrf.mxu0
  %v1105 = vadd.f32 0.0, %v1104
  %v1106 = vpop.f32.mrf.mxu0
  %1107 = vdwg.mxu0
  %v1109 = vrot.slane %v1105, 6
  %v1111 = vadd.f32 %v935, %v1109
  %v1112 = vxor.u32 %v1111, 2147483648
  %v1113 = vmul.f32 %v1112, 1.442695
  %v1114 = vpow.pop %v1113
  %v1115 = vadd.f32 %v1114, 1.0
  %v1116 = vrcp.pop %v1115
  %v1117 = vmul.f32 1.0, %v1116
  %v1118 = vtanh.pop %v1111
  %v1120 = vrot.slane %v1026, 6
  %v1122 = vmul.f32 %v1117, %v1120
  %1124 = vrot.lane.b32.xlu0 %v1118, 32
  %v1125 = vpop.permute.xlu0 %1124
  %v1127 = vmul.f32 %v1117, %v1125
  %1129 = vrot.lane.b32.xlu0 %v1127, 32
  %v1130 = vpop.permute.xlu0 %1129
  %v1132 = vadd.f32 %v1122, %v1130
  %v1133 = vtanh.pop %v1132
  %1135 = vrot.lane.b32.xlu0 %v1133, 32
  %v1136 = vpop.permute.xlu0 %1135
  %v1138 = vmul.f32 %v1117, %v1136
  %v1140 = vrot.slane %v846, 2
  %v1143 = vrot.slane %v1138, 1
  %v1145 = vsel %vm185, %v1140, %v1143
  %v1146 = vld [vmem:[%s11] sm:$0xff]
  %v1147 = vld [vmem:[%s11 + $0x8] sm:$0xff]
  %v1148 = vld [vmem:[%s11 + $0x10] sm:$0xff]
  %v1149 = vld [vmem:[%s11 + $0x18] sm:$0xff]
  %v1150 = vrot.slane %v846, 3
  %v1152 = vrot.slane %v1138, 2
  %v1154 = vsel %vm185, %v1150, %v1152
  %v1155 = vld [vmem:[%s11 + $0x20] sm:$0xff]
  %v1156 = vld [vmem:[%s11 + $0x28] sm:$0xff]
  %v1157 = vld [vmem:[%s11 + $0x30] sm:$0xff]
  %v1158 = vld [vmem:[%s11 + $0x38] sm:$0xff]
  %1160 = vrot.lane.b32.xlu0 %v1154, 64
  %v1161 = vpop.permute.xlu0 %1160
  %v1162 = vsel %vm642, %v1161, 0
  %1164 = vmatprep.subr.mxu0 0.0
  %1165 = vmatpush1.msra.mxu0 0.0
  %1166 = vmatprep.subr.mxu0 0.0
  %1167 = vmatpush1.msra.mxu0 0.0
  %1168 = vmatprep.subr.mxu0 0.0
  %1169 = vmatpush1.msra.mxu0 0.0
  %1170 = vmatprep.subr.mxu0 0.0
  %1171 = vmatpush1.msra.mxu0 0.0
  %1172 = vmatprep.subr.mxu0 0.0
  %1173 = vmatpush1.msra.mxu0 0.0
  %1174 = vmatprep.subr.mxu0 0.0
  %1175 = vmatpush1.msra.mxu0 0.0
  %1176 = vmatprep.subr.mxu0 0.0
  %1177 = vmatpush1.msra.mxu0 0.0
  %1178 = vmatprep.subr.mxu0 0.0
  %1179 = vmatpush1.msra.mxu0 0.0
  %1180 = vmatprep.subr.mxu0 0.0
  %1181 = vmatpush1.msra.mxu0 0.0
  %1182 = vmatprep.subr.mxu0 0.0
  %1183 = vmatpush1.msra.mxu0 0.0
  %1184 = vmatprep.subr.mxu0 0.0
  %1185 = vmatpush1.msra.mxu0 0.0
  %1186 = vmatprep.subr.mxu0 0.0
  %1187 = vmatpush1.msra.mxu0 0.0
  %1188 = vmatprep.subr.mxu0 0.0
  %1189 = vmatpush1.msra.mxu0 %v1158
  %1190 = vmatprep.subr.mxu0 0.0
  %1191 = vmatpush1.msra.mxu0 %v1157
  %1192 = vmatprep.subr.mxu0 0.0
  %1193 = vmatpush1.msra.mxu0 %v1156
  %1194 = vmatprep.subr.mxu0 0.0
  %1195 = vmatpush1.msra.mxu0 %v1155
  %1196 = vmatprep.subr.mxu0 0.0
  %1197 = vmatpush2.msra.mxu0 0.0
  %1198 = vmatprep.subr.mxu0 0.0
  %1199 = vmatpush2.msra.mxu0 0.0
  %1200 = vmatprep.subr.mxu0 0.0
  %1201 = vmatpush2.msra.mxu0 0.0
  %1202 = vmatprep.subr.mxu0 0.0
  %1203 = vmatpush2.msra.mxu0 0.0
  %1204 = vmatprep.subr.mxu0 0.0
  %1205 = vmatpush2.msra.mxu0 0.0
  %1206 = vmatprep.subr.mxu0 0.0
  %1207 = vmatpush2.msra.mxu0 0.0
  %1208 = vmatprep.subr.mxu0 0.0
  %1209 = vmatpush2.msra.mxu0 0.0
  %1210 = vmatprep.subr.mxu0 0.0
  %1211 = vmatpush2.msra.mxu0 0.0
  %1212 = vmatprep.subr.mxu0 0.0
  %1213 = vmatpush2.msra.mxu0 0.0
  %1214 = vmatprep.subr.mxu0 0.0
  %1215 = vmatpush2.msra.mxu0 0.0
  %1216 = vmatprep.subr.mxu0 0.0
  %1217 = vmatpush2.msra.mxu0 0.0
  %1218 = vmatprep.subr.mxu0 0.0
  %1219 = vmatpush2.msra.mxu0 0.0
  %1220 = vmatprep.subr.mxu0 0.0
  %1221 = vmatpush2.msra.mxu0 0.0
  %1222 = vmatprep.subr.mxu0 0.0
  %1223 = vmatpush2.msra.mxu0 0.0
  %1224 = vmatprep.subr.mxu0 0.0
  %1225 = vmatpush2.msra.mxu0 0.0
  %1226 = vmatprep.subr.mxu0 0.0
  %1227 = vmatpush2.msra.mxu0 0.0
  %1228 = vmatprep.mubr.f32.mxu0 0.0
  %1229 = vmatmul.mubr.f32.gmra.mxu0 %v1162
  %v1230 = vpop.f32.mrf.mxu0
  %v1231 = vadd.f32 0.0, %v1230
  %v1232 = vpop.f32.mrf.mxu0
  %1233 = vdwg.mxu0
  %1235 = vrot.lane.b32.xlu0 %v1145, 64
  %v1236 = vpop.permute.xlu0 %1235
  %v1237 = vsel %vm642, %v1236, 0
  %1239 = vmatprep.subr.mxu0 0.0
  %1240 = vmatpush1.msra.mxu0 0.0
  %1241 = vmatprep.subr.mxu0 0.0
  %1242 = vmatpush1.msra.mxu0 0.0
  %1243 = vmatprep.subr.mxu0 0.0
  %1244 = vmatpush1.msra.mxu0 0.0
  %1245 = vmatprep.subr.mxu0 0.0
  %1246 = vmatpush1.msra.mxu0 0.0
  %1247 = vmatprep.subr.mxu0 0.0
  %1248 = vmatpush1.msra.mxu0 0.0
  %1249 = vmatprep.subr.mxu0 0.0
  %1250 = vmatpush1.msra.mxu0 0.0
  %1251 = vmatprep.subr.mxu0 0.0
  %1252 = vmatpush1.msra.mxu0 0.0
  %1253 = vmatprep.subr.mxu0 0.0
  %1254 = vmatpush1.msra.mxu0 0.0
  %1255 = vmatprep.subr.mxu0 0.0
  %1256 = vmatpush1.msra.mxu0 0.0
  %1257 = vmatprep.subr.mxu0 0.0
  %1258 = vmatpush1.msra.mxu0 0.0
  %1259 = vmatprep.subr.mxu0 0.0
  %1260 = vmatpush1.msra.mxu0 0.0
  %1261 = vmatprep.subr.mxu0 0.0
  %1262 = vmatpush1.msra.mxu0 0.0
  %1263 = vmatprep.subr.mxu0 0.0
  %1264 = vmatpush1.msra.mxu0 %v1149
  %1265 = vmatprep.subr.mxu0 0.0
  %1266 = vmatpush1.msra.mxu0 %v1148
  %1267 = vmatprep.subr.mxu0 0.0
  %1268 = vmatpush1.msra.mxu0 %v1147
  %1269 = vmatprep.subr.mxu0 0.0
  %1270 = vmatpush1.msra.mxu0 %v1146
  %1271 = vmatprep.subr.mxu0 0.0
  %1272 = vmatpush2.msra.mxu0 0.0
  %1273 = vmatprep.subr.mxu0 0.0
  %1274 = vmatpush2.msra.mxu0 0.0
  %1275 = vmatprep.subr.mxu0 0.0
  %1276 = vmatpush2.msra.mxu0 0.0
  %1277 = vmatprep.subr.mxu0 0.0
  %1278 = vmatpush2.msra.mxu0 0.0
  %1279 = vmatprep.subr.mxu0 0.0
  %1280 = vmatpush2.msra.mxu0 0.0
  %1281 = vmatprep.subr.mxu0 0.0
  %1282 = vmatpush2.msra.mxu0 0.0
  %1283 = vmatprep.subr.mxu0 0.0
  %1284 = vmatpush2.msra.mxu0 0.0
  %1285 = vmatprep.subr.mxu0 0.0
  %1286 = vmatpush2.msra.mxu0 0.0
  %1287 = vmatprep.subr.mxu0 0.0
  %1288 = vmatpush2.msra.mxu0 0.0
  %1289 = vmatprep.subr.mxu0 0.0
  %1290 = vmatpush2.msra.mxu0 0.0
  %1291 = vmatprep.subr.mxu0 0.0
  %1292 = vmatpush2.msra.mxu0 0.0
  %1293 = vmatprep.subr.mxu0 0.0
  %1294 = vmatpush2.msra.mxu0 0.0
  %1295 = vmatprep.subr.mxu0 0.0
  %1296 = vmatpush2.msra.mxu0 0.0
  %1297 = vmatprep.subr.mxu0 0.0
  %1298 = vmatpush2.msra.mxu0 0.0
  %1299 = vmatprep.subr.mxu0 0.0
  %1300 = vmatpush2.msra.mxu0 0.0
  %1301 = vmatprep.subr.mxu0 0.0
  %1302 = vmatpush2.msra.mxu0 0.0
  %1303 = vmatprep.mubr.f32.mxu0 0.0
  %1304 = vmatmul.mubr.f32.gmra.mxu0 %v1237
  %v1305 = vpop.f32.mrf.mxu0
  %v1306 = vadd.f32 %v1231, %v1305
  %v1307 = vpop.f32.mrf.mxu0
  %1308 = vdwg.mxu0
  %v1309 = vld [vmem:[%s12] sm:$0x1]
  %v1311 = vlaneseq
  %v1312 = vshrl.u32 %v1311, 7
  %v1313 = vsub.s32 0, %v1312
  %v1314 = vrot.slane %v1309, %v1313
  %v1316 = vadd.f32 %v1306, %v1314
  %1317 = vst [vmem:[%s13] sm:$0x3] %v1316
  // Predicated region
  $region54: #{conv_lstm_forward.1} parent=0 // pred_check
    _
  $region55: #{conv_lstm_forward.1} parent=0 // pred_check_branch
    %1319 = sbr.rel (0) target = $region57
  $region56: #{conv_lstm_forward.1} parent=0 // pred_region
    _
  $region57: #{conv_lstm_forward.1} parent=0 // pred_fallthru
    _
  // Predicated region
  $region58: #{conv_lstm_forward.1} parent=0 // pred_check
    _
  $region59: #{conv_lstm_forward.1} parent=0 // pred_check_branch
    %1321 = sbr.rel (0) target = $region61
  $region60: #{conv_lstm_forward.1} parent=0 // pred_region
    _
  $region61: #{conv_lstm_forward.1} parent=0 // pred_fallthru
    _

</llo_original>
